<compile_context>
chip_gen: v7x
topology: tpu7x:2x2x1
jax: 0.10.0
libtpu: 0.0.40
codegen_flags: <defaults>
</compile_context>

<pallas_src>
from functools import partial

import jax
import jax.numpy as jnp
from jax.experimental import pallas as pl
from jax.experimental.pallas import tpu as pltpu

LANE = 128


def _round_up(x, m):
    return (x + m - 1) // m * m


def _pad_lanes(x, d_pad):
    n, d = x.shape
    if d == d_pad:
        return x
    return jnp.pad(x, ((0, 0), (0, d_pad - d)))


def _store_carry(dst_ref, act):
    """Store an (n, Hmax) activation into an (n, Dmax) carry ref.

    Width mismatch is handled statically; columns beyond the layer's true
    hidden width are provably zero, so truncation / zero-fill is exact.
    """
    d = dst_ref.shape[-1]
    h = act.shape[-1]
    val = act.astype(dst_ref.dtype)
    if d == h:
        dst_ref[...] = val
    elif d < h:
        dst_ref[...] = val[:, :d]
    else:
        dst_ref[...] = jnp.zeros_like(dst_ref)
        dst_ref[:, :h] = val


# ---------------------------------------------------------------------------
# Fused kernel: grid = (layer, hop).  Per hop i (matching the PyTorch ref):
#   K_l   = A   @ Korder_r          K_r   = A^T @ Korder_l
#   mul_l = K_l * Korder_l          mul_r = K_r * Korder_r
#   conv  += lin1(K) + lin2(mul)    (biases folded into the epilogues)
#   Korder <- K + mul
# Layer 0 epilogue: carries <- relu(conv + hop*(b1+b2)), conv <- 0.
# Layer 1 epilogue: out = relu(conv + hop*(b1+b2)).
# ---------------------------------------------------------------------------
def _fused_layers_kernel(a_l_ref, a_r_ref, lfeat_ref, rfeat_ref,
                         w1_ref, w2_ref, b_ref,
                         out_l_ref, out_r_ref,
                         kl_ref, kr_ref, klb_ref, krb_ref):
    layer = pl.program_id(0)
    hop_i = pl.program_id(1)
    last_layer = pl.num_programs(0) - 1
    last_hop = pl.num_programs(1) - 1

    @pl.when(jnp.logical_and(layer == 0, hop_i == 0))
    def _init():
        lf = lfeat_ref[...]
        rf = rfeat_ref[...]
        kl_ref[...] = lf
        kr_ref[...] = rf
        klb_ref[...] = lf.astype(klb_ref.dtype)
        krb_ref[...] = rf.astype(krb_ref.dtype)
        out_l_ref[...] = jnp.zeros_like(out_l_ref)
        out_r_ref[...] = jnp.zeros_like(out_r_ref)

    # spmm realized as dense bf16 MXU matmuls with f32 accumulation; the bf16
    # shadow carries are the RHS (no f32->bf16 pack on the critical path).
    k_l = jnp.dot(a_l_ref[...], krb_ref[...],
                  preferred_element_type=jnp.float32)
    k_r = jnp.dot(a_r_ref[...], klb_ref[...],
                  preferred_element_type=jnp.float32)

    mul_l = k_l * kl_ref[...]      # torch.mul (f32 VPU)
    mul_r = k_r * kr_ref[...]

    # lin1(K) + lin2(mul): two dots against separate bf16 weight refs
    # (no concatenate temporaries), accumulated directly into the
    # VMEM-resident output blocks.
    w1 = w1_ref[...]
    w2 = w2_ref[...]
    out_l_ref[...] += (
        jnp.dot(k_l.astype(jnp.bfloat16), w1, preferred_element_type=jnp.float32)
        + jnp.dot(mul_l.astype(jnp.bfloat16), w2, preferred_element_type=jnp.float32))
    out_r_ref[...] += (
        jnp.dot(k_r.astype(jnp.bfloat16), w1, preferred_element_type=jnp.float32)
        + jnp.dot(mul_r.astype(jnp.bfloat16), w2, preferred_element_type=jnp.float32))

    # Korder carry for the next hop (f32 master + bf16 shadow).
    new_kl = k_l + mul_l
    new_kr = k_r + mul_r
    kl_ref[...] = new_kl
    kr_ref[...] = new_kr
    klb_ref[...] = new_kl.astype(klb_ref.dtype)
    krb_ref[...] = new_kr.astype(krb_ref.dtype)

    @pl.when(jnp.logical_and(layer == 0, hop_i == last_hop))
    def _layer_transition():
        # b_ref holds hop * (b1 + b2) for layer 0; ReLU fused (torch.relu).
        b = b_ref[...]
        act_l = jnp.maximum(out_l_ref[...] + b, 0.0)
        act_r = jnp.maximum(out_r_ref[...] + b, 0.0)
        _store_carry(kl_ref, act_l)
        _store_carry(klb_ref, act_l)
        _store_carry(kr_ref, act_r)
        _store_carry(krb_ref, act_r)
        out_l_ref[...] = jnp.zeros_like(out_l_ref)
        out_r_ref[...] = jnp.zeros_like(out_r_ref)

    @pl.when(jnp.logical_and(layer == last_layer, hop_i == last_hop))
    def _finalize():
        b = b_ref[...]
        out_l_ref[...] = jnp.maximum(out_l_ref[...] + b, 0.0)
        out_r_ref[...] = jnp.maximum(out_r_ref[...] + b, 0.0)


def fused_layers_call(a_l, a_r, lp, rp, w1_stk, w2_stk, b_stk, hop):
    """One pallas_call covering both graph_inception layers + ReLUs.

    a_l: [N_l, N_r] bf16, a_r: [N_r, N_l] bf16 (A^T),
    lp: [N_l, Dmax] f32, rp: [N_r, Dmax] f32 (lane padded),
    w1_stk/w2_stk: [2, Dmax, Hmax] bf16 (lin1/lin2, per layer),
    b_stk: [2, 1, Hmax] f32 (= hop * (b1 + b2), per layer).
    Returns lane-padded (out_l [N_l, Hmax], out_r [N_r, Hmax]) f32.
    """
    n_l, d_max = lp.shape
    n_r = rp.shape[0]
    h_max = w1_stk.shape[-1]

    # Advisory cost estimate for the XLA scheduler.
    flops = 2 * hop * (4 * n_l * n_r * d_max + 4 * (n_l + n_r) * d_max * h_max)
    bytes_accessed = (
        (a_l.size + a_r.size) * 2
        + (lp.size + rp.size) * 4
        + (w1_stk.size + w2_stk.size) * 2
        + b_stk.size * 4
        + (n_l + n_r) * h_max * 4)

    # Explicit VMEM budget (v5e default scoped limit is only 16 MiB).
    blk_bytes = 2 * (                              # double-buffered input blocks
        (n_l * n_r + n_r * n_l) * 2                # A, A^T (bf16)
        + (n_l + n_r) * d_max * 4                  # features (f32)
        + 2 * d_max * h_max * 2                    # W1 + W2 blocks (bf16)
        + h_max * 4)                               # bias block (f32)
    state_bytes = ((n_l + n_r) * h_max * 4         # output accumulators
                   + (n_l + n_r) * d_max * (4 + 2))  # carry f32 + bf16 shadow
    vmem_limit = int(min(max(1.25 * (blk_bytes + state_bytes) + (2 << 20),
                             32 << 20), 100 << 20))

    return pl.pallas_call(
        _fused_layers_kernel,
        out_shape=(jax.ShapeDtypeStruct((n_l, h_max), jnp.float32),
                   jax.ShapeDtypeStruct((n_r, h_max), jnp.float32)),
        grid_spec=pltpu.PrefetchScalarGridSpec(
            num_scalar_prefetch=0,
            grid=(2, hop),                                     # (layer, hop)
            in_specs=[
                pl.BlockSpec((n_l, n_r), lambda L, h: (0, 0)),          # A
                pl.BlockSpec((n_r, n_l), lambda L, h: (0, 0)),          # A^T
                pl.BlockSpec((n_l, d_max), lambda L, h: (0, 0)),        # l_feat
                pl.BlockSpec((n_r, d_max), lambda L, h: (0, 0)),        # r_feat
                pl.BlockSpec((None, d_max, h_max), lambda L, h: (L, 0, 0)),  # W1[L]
                pl.BlockSpec((None, d_max, h_max), lambda L, h: (L, 0, 0)),  # W2[L]
                pl.BlockSpec((None, 1, h_max), lambda L, h: (L, 0, 0)),      # b[L]
            ],
            out_specs=[
                pl.BlockSpec((n_l, h_max), lambda L, h: (0, 0)),
                pl.BlockSpec((n_r, h_max), lambda L, h: (0, 0)),
            ],
            scratch_shapes=[
                pltpu.VMEM((n_l, d_max), jnp.float32),    # Korder_l (f32)
                pltpu.VMEM((n_r, d_max), jnp.float32),    # Korder_r (f32)
                pltpu.VMEM((n_l, d_max), jnp.bfloat16),   # Korder_l bf16 shadow
                pltpu.VMEM((n_r, d_max), jnp.bfloat16),   # Korder_r bf16 shadow
            ],
        ),
        compiler_params=pltpu.CompilerParams(
            dimension_semantics=("arbitrary", "arbitrary"),
            vmem_limit_bytes=vmem_limit),
        cost_estimate=pl.CostEstimate(flops=flops, transcendentals=0,
                                      bytes_accessed=bytes_accessed),
    )(a_l, a_r, lp, rp, w1_stk, w2_stk, b_stk)


# ---------------------------------------------------------------------------
# Wrapper: lane-pad features / weights, fold per-hop biases, hoist A^T once.
# Weights stored pre-transposed as [in, out] (kernel computes X @ W + b,
# matching PyTorch's x @ W.T + b).
# ---------------------------------------------------------------------------
@partial(jax.jit, static_argnames=("hop",))
def layers_forward(l_feat, r_feat, network, params, hop):
    w1_c1, b1_c1, w2_c1, b2_c1 = params["conv1"]
    w1_c2, b1_c2, w2_c2, b2_c2 = params["conv2"]
    inputdims, hiddendims = w1_c1.shape
    outputdims = w1_c2.shape[1]

    d1 = _round_up(inputdims, LANE)
    h1 = _round_up(hiddendims, LANE)
    h2 = _round_up(outputdims, LANE)
    d_max = max(d1, h1)      # carry / projection-input width (both layers)
    h_max = max(h1, h2)      # accumulator / projection-output width

    # bf16 adjacency for the MXU spmm; transpose computed once, resident in
    # VMEM across both layers and all hops inside the fused kernel.
    a_l = network.astype(jnp.bfloat16)
    a_r = network.T.astype(jnp.bfloat16)

    def put(slab, w, li):
        return slab.at[li, :w.shape[0], :w.shape[1]].set(w.astype(slab.dtype))

    w1_stk = jnp.zeros((2, d_max, h_max), jnp.bfloat16)
    w1_stk = put(w1_stk, w1_c1, 0)
    w1_stk = put(w1_stk, w1_c2, 1)
    w2_stk = jnp.zeros((2, d_max, h_max), jnp.bfloat16)
    w2_stk = put(w2_stk, w2_c1, 0)
    w2_stk = put(w2_stk, w2_c2, 1)

    b_stk = jnp.zeros((2, 1, h_max), jnp.float32)
    b_stk = b_stk.at[0, 0, :hiddendims].set(float(hop) * (b1_c1 + b2_c1))
    b_stk = b_stk.at[1, 0, :outputdims].set(float(hop) * (b1_c2 + b2_c2))

    lp = _pad_lanes(l_feat, d_max)
    rp = _pad_lanes(r_feat, d_max)

    y2, z2 = fused_layers_call(a_l, a_r, lp, rp, w1_stk, w2_stk, b_stk, hop)
    return y2[:, :outputdims], z2[:, :outputdims]


# ---------------------------------------------------------------------------
# Pure f32 reference (HIGHEST matmul precision, no bf16 anywhere) mirroring
# the PyTorch module, used as the numerical smoke test.
# ---------------------------------------------------------------------------
def reference_forward_fp32(l_feat, r_feat, network, params, hop):
    P = jax.lax.Precision.HIGHEST
    a_l = network
    a_r = network.T

    def gi(lf, rf, p):
        w1, b1, w2, b2 = p
        kl, kr = lf, rf
        cl = 0.0
        cr = 0.0
        for _ in range(hop):
            k_l = jnp.dot(a_l, kr, precision=P)
            k_r = jnp.dot(a_r, kl, precision=P)
            mul_l = k_l * kl
            mul_r = k_r * kr
            cl = cl + (jnp.dot(k_l, w1, precision=P) + b1) \
                    + (jnp.dot(mul_l, w2, precision=P) + b2)
            cr = cr + (jnp.dot(k_r, w1, precision=P) + b1) \
                    + (jnp.dot(mul_r, w2, precision=P) + b2)
            kl = k_l + mul_l
            kr = k_r + mul_r
        return cl, cr

    x1l, x1r = gi(l_feat, r_feat, params["conv1"])
    y1, z1 = jnp.maximum(x1l, 0.0), jnp.maximum(x1r, 0.0)
    x2l, x2r = gi(y1, z1, params["conv2"])
    return jnp.maximum(x2l, 0.0), jnp.maximum(x2r, 0.0)


# ---------------------------------------------------------------------------
# Deterministic parameter init (mimics torch.nn.Linear default:
# U(-1/sqrt(in), 1/sqrt(in))).  Weight stored as [in, out].
# ---------------------------------------------------------------------------
def init_linear(key, in_dim, out_dim):
    kw, kb = jax.random.split(key)
    bound = 1.0 / jnp.sqrt(jnp.float32(in_dim))
    w = jax.random.uniform(kw, (in_dim, out_dim), jnp.float32, -bound, bound)
    b = jax.random.uniform(kb, (out_dim,), jnp.float32, -bound, bound)
    return w, b


def init_graph_inception(key, in_dim, out_dim):
    k1, k2 = jax.random.split(key)
    w1, b1 = init_linear(k1, in_dim, out_dim)  # lin1
    w2, b2 = init_linear(k2, in_dim, out_dim)  # lin2
    return (w1, b1, w2, b2)


if __name__ == "__main__":
    hop = 2
    num_nodes = 64        # N_l == N_r == N
    inputdims = 32
    hiddendims = 16
    outputdims = 8

    key = jax.random.PRNGKey(0)
    k_lf, k_rf, k_net, k_c1, k_c2 = jax.random.split(key, 5)

    l_feat = jax.random.normal(k_lf, (num_nodes, inputdims), jnp.float32)
    r_feat = jax.random.normal(k_rf, (num_nodes, inputdims), jnp.float32)
    # Dense stand-in for the sparse "network" adjacency (non-symmetric so the
    # transpose path network_r differs from network_l).
    network = jax.random.uniform(k_net, (num_nodes, num_nodes), jnp.float32) * 0.05

    params = {
        "conv1": init_graph_inception(k_c1, inputdims, hiddendims),
        "conv2": init_graph_inception(k_c2, hiddendims, outputdims),
    }

    y2, z2 = layers_forward(l_feat, r_feat, network, params, hop)
    jax.block_until_ready((y2, z2))
    assert y2.shape == (num_nodes, outputdims)
    assert z2.shape == (num_nodes, outputdims)

    # Validate against a full-f32 reference (bounds the bf16 spmm/projection error).
    ref_y2, ref_z2 = reference_forward_fp32(l_feat, r_feat, network, params, hop)
    ok = bool(jnp.allclose(y2, ref_y2, rtol=1e-1, atol=1e-1)) and \
         bool(jnp.allclose(z2, ref_z2, rtol=1e-1, atol=1e-1))
    assert ok, "Pallas output mismatch vs pure-f32 reference"

    print("KERNEL_OK")
</pallas_src>

<mosaic_0001>
module attributes {stable_mosaic.version = 11 : i64} {
  func.func @_fused_layers_kernel(%arg0: i32, %arg1: i32, %arg2: memref<64x64xbf16, #tpu.memory_space<vmem>>, %arg3: memref<64x64xbf16, #tpu.memory_space<vmem>>, %arg4: memref<64x128xf32, #tpu.memory_space<vmem>>, %arg5: memref<64x128xf32, #tpu.memory_space<vmem>>, %arg6: memref<1x128x128xbf16, #tpu.memory_space<vmem>>, %arg7: memref<1x128x128xbf16, #tpu.memory_space<vmem>>, %arg8: memref<1x1x128xf32, #tpu.memory_space<vmem>>, %arg9: memref<64x128xf32, #tpu.memory_space<vmem>>, %arg10: memref<64x128xf32, #tpu.memory_space<vmem>>, %arg11: memref<64x128xf32, #tpu.memory_space<vmem>>, %arg12: memref<64x128xf32, #tpu.memory_space<vmem>>, %arg13: memref<64x128xbf16, #tpu.memory_space<vmem>>, %arg14: memref<64x128xbf16, #tpu.memory_space<vmem>>) attributes {dimension_semantics = [#tpu.dimension_semantics<arbitrary>, #tpu.dimension_semantics<arbitrary>], iteration_bounds = array<i64: 2, 2>, scalar_prefetch = 0 : i64, scratch_operands = 4 : i64, tpu.core_type = #tpu.core_type<tc>, window_params = [{pipeline_mode = #tpu.pipeline_mode<synchronous>, transform_indices = @transform_0, window_bounds = array<i64: 64, 64>}, {pipeline_mode = #tpu.pipeline_mode<synchronous>, transform_indices = @transform_1, window_bounds = array<i64: 64, 64>}, {pipeline_mode = #tpu.pipeline_mode<synchronous>, transform_indices = @transform_2, window_bounds = array<i64: 64, 128>}, {pipeline_mode = #tpu.pipeline_mode<synchronous>, transform_indices = @transform_3, window_bounds = array<i64: 64, 128>}, {transform_indices = @transform_4, window_bounds = array<i64: 1, 128, 128>}, {transform_indices = @transform_5, window_bounds = array<i64: 1, 128, 128>}, {transform_indices = @transform_6, window_bounds = array<i64: 1, 1, 128>}, {pipeline_mode = #tpu.pipeline_mode<synchronous>, transform_indices = @transform_7, window_bounds = array<i64: 64, 128>}, {pipeline_mode = #tpu.pipeline_mode<synchronous>, transform_indices = @transform_8, window_bounds = array<i64: 64, 128>}]} {
    %c0_i32 = arith.constant 0 : i32
    %0 = arith.cmpi eq, %arg0, %c0_i32 : i32
    %c0_i32_0 = arith.constant 0 : i32
    %1 = arith.cmpi eq, %arg1, %c0_i32_0 : i32
    %2 = arith.andi %0, %1 : i1
    %3 = arith.extui %2 : i1 to i32
    %c0_i32_1 = arith.constant 0 : i32
    %4 = arith.cmpi ne, %3, %c0_i32_1 : i32
    scf.if %4 {
      %c0_45 = arith.constant 0 : index
      %c0_46 = arith.constant 0 : index
      %53 = vector.load %arg4[%c0_45, %c0_46] : memref<64x128xf32, #tpu.memory_space<vmem>>, vector<64x128xf32>
      %c0_47 = arith.constant 0 : index
      %c0_48 = arith.constant 0 : index
      %54 = vector.load %arg5[%c0_47, %c0_48] : memref<64x128xf32, #tpu.memory_space<vmem>>, vector<64x128xf32>
      %c0_49 = arith.constant 0 : index
      %c0_50 = arith.constant 0 : index
      %55 = vector.load %arg11[%c0_49, %c0_50] : memref<64x128xf32, #tpu.memory_space<vmem>>, vector<64x128xf32>
      tpu.vector_store %arg11[%c0_49, %c0_50], %53 {strides = array<i32>} : memref<64x128xf32, #tpu.memory_space<vmem>>, vector<64x128xf32>,
      %c0_51 = arith.constant 0 : index
      %c0_52 = arith.constant 0 : index
      %56 = vector.load %arg12[%c0_51, %c0_52] : memref<64x128xf32, #tpu.memory_space<vmem>>, vector<64x128xf32>
      tpu.vector_store %arg12[%c0_51, %c0_52], %54 {strides = array<i32>} : memref<64x128xf32, #tpu.memory_space<vmem>>, vector<64x128xf32>,
      %57 = arith.truncf %53 : vector<64x128xf32> to vector<64x128xbf16>
      %c0_53 = arith.constant 0 : index
      %c0_54 = arith.constant 0 : index
      %58 = vector.load %arg13[%c0_53, %c0_54] : memref<64x128xbf16, #tpu.memory_space<vmem>>, vector<64x128xbf16>
      tpu.vector_store %arg13[%c0_53, %c0_54], %57 {strides = array<i32>} : memref<64x128xbf16, #tpu.memory_space<vmem>>, vector<64x128xbf16>,
      %59 = arith.truncf %54 : vector<64x128xf32> to vector<64x128xbf16>
      %c0_55 = arith.constant 0 : index
      %c0_56 = arith.constant 0 : index
      %60 = vector.load %arg14[%c0_55, %c0_56] : memref<64x128xbf16, #tpu.memory_space<vmem>>, vector<64x128xbf16>
      tpu.vector_store %arg14[%c0_55, %c0_56], %59 {strides = array<i32>} : memref<64x128xbf16, #tpu.memory_space<vmem>>, vector<64x128xbf16>,
      %cst_57 = arith.constant 0.000000e+00 : f32
      %61 = vector.broadcast %cst_57 : f32 to vector<64x128xf32>
      %c0_58 = arith.constant 0 : index
      %c0_59 = arith.constant 0 : index
      %62 = vector.load %arg9[%c0_58, %c0_59] : memref<64x128xf32, #tpu.memory_space<vmem>>, vector<64x128xf32>
      tpu.vector_store %arg9[%c0_58, %c0_59], %61 {strides = array<i32>} : memref<64x128xf32, #tpu.memory_space<vmem>>, vector<64x128xf32>,
      %cst_60 = arith.constant 0.000000e+00 : f32
      %63 = vector.broadcast %cst_60 : f32 to vector<64x128xf32>
      %c0_61 = arith.constant 0 : index
      %c0_62 = arith.constant 0 : index
      %64 = vector.load %arg10[%c0_61, %c0_62] : memref<64x128xf32, #tpu.memory_space<vmem>>, vector<64x128xf32>
      tpu.vector_store %arg10[%c0_61, %c0_62], %63 {strides = array<i32>} : memref<64x128xf32, #tpu.memory_space<vmem>>, vector<64x128xf32>,
    } else {
    }
    %c0 = arith.constant 0 : index
    %c0_2 = arith.constant 0 : index
    %5 = vector.load %arg2[%c0, %c0_2] : memref<64x64xbf16, #tpu.memory_space<vmem>>, vector<64x64xbf16>
    %c0_3 = arith.constant 0 : index
    %c0_4 = arith.constant 0 : index
    %6 = vector.load %arg14[%c0_3, %c0_4] : memref<64x128xbf16, #tpu.memory_space<vmem>>, vector<64x128xbf16>
    %cst = arith.constant dense<0.000000e+00> : vector<64x128xf32>
    %7 = tpu.matmul %5, %6, %cst {dimension_numbers = #tpu.dot_dimension_numbers<[1], [0], [0], [1], [0, 0, 1, 1], [], []>} : vector<64x64xbf16>, vector<64x128xbf16>, vector<64x128xf32> -> vector<64x128xf32>
    %c0_5 = arith.constant 0 : index
    %c0_6 = arith.constant 0 : index
    %8 = vector.load %arg3[%c0_5, %c0_6] : memref<64x64xbf16, #tpu.memory_space<vmem>>, vector<64x64xbf16>
    %c0_7 = arith.constant 0 : index
    %c0_8 = arith.constant 0 : index
    %9 = vector.load %arg13[%c0_7, %c0_8] : memref<64x128xbf16, #tpu.memory_space<vmem>>, vector<64x128xbf16>
    %cst_9 = arith.constant dense<0.000000e+00> : vector<64x128xf32>
    %10 = tpu.matmul %8, %9, %cst_9 {dimension_numbers = #tpu.dot_dimension_numbers<[1], [0], [0], [1], [0, 0, 1, 1], [], []>} : vector<64x64xbf16>, vector<64x128xbf16>, vector<64x128xf32> -> vector<64x128xf32>
    %c0_10 = arith.constant 0 : index
    %c0_11 = arith.constant 0 : index
    %11 = vector.load %arg11[%c0_10, %c0_11] : memref<64x128xf32, #tpu.memory_space<vmem>>, vector<64x128xf32>
    %12 = arith.mulf %7, %11 : vector<64x128xf32>
    %c0_12 = arith.constant 0 : index
    %c0_13 = arith.constant 0 : index
    %13 = vector.load %arg12[%c0_12, %c0_13] : memref<64x128xf32, #tpu.memory_space<vmem>>, vector<64x128xf32>
    %14 = arith.mulf %10, %13 : vector<64x128xf32>
    %c0_14 = arith.constant 0 : index
    %c0_15 = arith.constant 0 : index
    %c0_16 = arith.constant 0 : index
    %15 = vector.load %arg6[%c0_14, %c0_15, %c0_16] : memref<1x128x128xbf16, #tpu.memory_space<vmem>>, vector<1x128x128xbf16>
    %16 = vector.shape_cast %15 : vector<1x128x128xbf16> to vector<128x128xbf16>
    %c0_17 = arith.constant 0 : index
    %c0_18 = arith.constant 0 : index
    %c0_19 = arith.constant 0 : index
    %17 = vector.load %arg7[%c0_17, %c0_18, %c0_19] : memref<1x128x128xbf16, #tpu.memory_space<vmem>>, vector<1x128x128xbf16>
    %18 = vector.shape_cast %17 : vector<1x128x128xbf16> to vector<128x128xbf16>
    %c0_20 = arith.constant 0 : index
    %c0_21 = arith.constant 0 : index
    %19 = vector.load %arg9[%c0_20, %c0_21] : memref<64x128xf32, #tpu.memory_space<vmem>>, vector<64x128xf32>
    %20 = arith.truncf %7 : vector<64x128xf32> to vector<64x128xbf16>
    %cst_22 = arith.constant dense<0.000000e+00> : vector<64x128xf32>
    %21 = tpu.matmul %20, %16, %cst_22 {dimension_numbers = #tpu.dot_dimension_numbers<[1], [0], [0], [1], [0, 0, 1, 1], [], []>} : vector<64x128xbf16>, vector<128x128xbf16>, vector<64x128xf32> -> vector<64x128xf32>
    %22 = arith.truncf %12 : vector<64x128xf32> to vector<64x128xbf16>
    %cst_23 = arith.constant dense<0.000000e+00> : vector<64x128xf32>
    %23 = tpu.matmul %22, %18, %cst_23 {dimension_numbers = #tpu.dot_dimension_numbers<[1], [0], [0], [1], [0, 0, 1, 1], [], []>} : vector<64x128xbf16>, vector<128x128xbf16>, vector<64x128xf32> -> vector<64x128xf32>
    %24 = arith.addf %21, %23 : vector<64x128xf32>
    %25 = arith.addf %19, %24 : vector<64x128xf32>
    %c0_24 = arith.constant 0 : index
    %c0_25 = arith.constant 0 : index
    %26 = vector.load %arg9[%c0_24, %c0_25] : memref<64x128xf32, #tpu.memory_space<vmem>>, vector<64x128xf32>
    tpu.vector_store %arg9[%c0_24, %c0_25], %25 {strides = array<i32>} : memref<64x128xf32, #tpu.memory_space<vmem>>, vector<64x128xf32>,
    %c0_26 = arith.constant 0 : index
    %c0_27 = arith.constant 0 : index
    %27 = vector.load %arg10[%c0_26, %c0_27] : memref<64x128xf32, #tpu.memory_space<vmem>>, vector<64x128xf32>
    %28 = arith.truncf %10 : vector<64x128xf32> to vector<64x128xbf16>
    %cst_28 = arith.constant dense<0.000000e+00> : vector<64x128xf32>
    %29 = tpu.matmul %28, %16, %cst_28 {dimension_numbers = #tpu.dot_dimension_numbers<[1], [0], [0], [1], [0, 0, 1, 1], [], []>} : vector<64x128xbf16>, vector<128x128xbf16>, vector<64x128xf32> -> vector<64x128xf32>
    %30 = arith.truncf %14 : vector<64x128xf32> to vector<64x128xbf16>
    %cst_29 = arith.constant dense<0.000000e+00> : vector<64x128xf32>
    %31 = tpu.matmul %30, %18, %cst_29 {dimension_numbers = #tpu.dot_dimension_numbers<[1], [0], [0], [1], [0, 0, 1, 1], [], []>} : vector<64x128xbf16>, vector<128x128xbf16>, vector<64x128xf32> -> vector<64x128xf32>
    %32 = arith.addf %29, %31 : vector<64x128xf32>
    %33 = arith.addf %27, %32 : vector<64x128xf32>
    %c0_30 = arith.constant 0 : index
    %c0_31 = arith.constant 0 : index
    %34 = vector.load %arg10[%c0_30, %c0_31] : memref<64x128xf32, #tpu.memory_space<vmem>>, vector<64x128xf32>
    tpu.vector_store %arg10[%c0_30, %c0_31], %33 {strides = array<i32>} : memref<64x128xf32, #tpu.memory_space<vmem>>, vector<64x128xf32>,
    %35 = arith.addf %7, %12 : vector<64x128xf32>
    %36 = arith.addf %10, %14 : vector<64x128xf32>
    %c0_32 = arith.constant 0 : index
    %c0_33 = arith.constant 0 : index
    %37 = vector.load %arg11[%c0_32, %c0_33] : memref<64x128xf32, #tpu.memory_space<vmem>>, vector<64x128xf32>
    tpu.vector_store %arg11[%c0_32, %c0_33], %35 {strides = array<i32>} : memref<64x128xf32, #tpu.memory_space<vmem>>, vector<64x128xf32>,
    %c0_34 = arith.constant 0 : index
    %c0_35 = arith.constant 0 : index
    %38 = vector.load %arg12[%c0_34, %c0_35] : memref<64x128xf32, #tpu.memory_space<vmem>>, vector<64x128xf32>
    tpu.vector_store %arg12[%c0_34, %c0_35], %36 {strides = array<i32>} : memref<64x128xf32, #tpu.memory_space<vmem>>, vector<64x128xf32>,
    %39 = arith.truncf %35 : vector<64x128xf32> to vector<64x128xbf16>
    %c0_36 = arith.constant 0 : index
    %c0_37 = arith.constant 0 : index
    %40 = vector.load %arg13[%c0_36, %c0_37] : memref<64x128xbf16, #tpu.memory_space<vmem>>, vector<64x128xbf16>
    tpu.vector_store %arg13[%c0_36, %c0_37], %39 {strides = array<i32>} : memref<64x128xbf16, #tpu.memory_space<vmem>>, vector<64x128xbf16>,
    %41 = arith.truncf %36 : vector<64x128xf32> to vector<64x128xbf16>
    %c0_38 = arith.constant 0 : index
    %c0_39 = arith.constant 0 : index
    %42 = vector.load %arg14[%c0_38, %c0_39] : memref<64x128xbf16, #tpu.memory_space<vmem>>, vector<64x128xbf16>
    tpu.vector_store %arg14[%c0_38, %c0_39], %41 {strides = array<i32>} : memref<64x128xbf16, #tpu.memory_space<vmem>>, vector<64x128xbf16>,
    %c0_i32_40 = arith.constant 0 : i32
    %43 = arith.cmpi eq, %arg0, %c0_i32_40 : i32
    %c1_i32 = arith.constant 1 : i32
    %44 = arith.cmpi eq, %arg1, %c1_i32 : i32
    %45 = arith.andi %43, %44 : i1
    %46 = arith.extui %45 : i1 to i32
    %c0_i32_41 = arith.constant 0 : i32
    %47 = arith.cmpi ne, %46, %c0_i32_41 : i32
    scf.if %47 {
      %c0_45 = arith.constant 0 : index
      %c0_46 = arith.constant 0 : index
      %c0_47 = arith.constant 0 : index
      %53 = vector.load %arg8[%c0_45, %c0_46, %c0_47] : memref<1x1x128xf32, #tpu.memory_space<vmem>>, vector<1x1x128xf32>
      %54 = vector.shape_cast %53 : vector<1x1x128xf32> to vector<1x128xf32>
      %c0_48 = arith.constant 0 : index
      %c0_49 = arith.constant 0 : index
      %55 = vector.load %arg9[%c0_48, %c0_49] : memref<64x128xf32, #tpu.memory_space<vmem>>, vector<64x128xf32>
      %56 = vector.broadcast %54 : vector<1x128xf32> to vector<64x128xf32>
      %57 = arith.addf %55, %56 : vector<64x128xf32>
      %cst_50 = arith.constant 0.000000e+00 : f32
      %58 = vector.broadcast %cst_50 : f32 to vector<64x128xf32>
      %59 = arith.maximumf %57, %58 : vector<64x128xf32>
      %c0_51 = arith.constant 0 : index
      %c0_52 = arith.constant 0 : index
      %60 = vector.load %arg10[%c0_51, %c0_52] : memref<64x128xf32, #tpu.memory_space<vmem>>, vector<64x128xf32>
      %61 = vector.broadcast %54 : vector<1x128xf32> to vector<64x128xf32>
      %62 = arith.addf %60, %61 : vector<64x128xf32>
      %cst_53 = arith.constant 0.000000e+00 : f32
      %63 = vector.broadcast %cst_53 : f32 to vector<64x128xf32>
      %64 = arith.maximumf %62, %63 : vector<64x128xf32>
      %c0_54 = arith.constant 0 : index
      %c0_55 = arith.constant 0 : index
      %65 = vector.load %arg11[%c0_54, %c0_55] : memref<64x128xf32, #tpu.memory_space<vmem>>, vector<64x128xf32>
      tpu.vector_store %arg11[%c0_54, %c0_55], %59 {strides = array<i32>} : memref<64x128xf32, #tpu.memory_space<vmem>>, vector<64x128xf32>,
      %66 = arith.truncf %59 : vector<64x128xf32> to vector<64x128xbf16>
      %c0_56 = arith.constant 0 : index
      %c0_57 = arith.constant 0 : index
      %67 = vector.load %arg13[%c0_56, %c0_57] : memref<64x128xbf16, #tpu.memory_space<vmem>>, vector<64x128xbf16>
      tpu.vector_store %arg13[%c0_56, %c0_57], %66 {strides = array<i32>} : memref<64x128xbf16, #tpu.memory_space<vmem>>, vector<64x128xbf16>,
      %c0_58 = arith.constant 0 : index
      %c0_59 = arith.constant 0 : index
      %68 = vector.load %arg12[%c0_58, %c0_59] : memref<64x128xf32, #tpu.memory_space<vmem>>, vector<64x128xf32>
      tpu.vector_store %arg12[%c0_58, %c0_59], %64 {strides = array<i32>} : memref<64x128xf32, #tpu.memory_space<vmem>>, vector<64x128xf32>,
      %69 = arith.truncf %64 : vector<64x128xf32> to vector<64x128xbf16>
      %c0_60 = arith.constant 0 : index
      %c0_61 = arith.constant 0 : index
      %70 = vector.load %arg14[%c0_60, %c0_61] : memref<64x128xbf16, #tpu.memory_space<vmem>>, vector<64x128xbf16>
      tpu.vector_store %arg14[%c0_60, %c0_61], %69 {strides = array<i32>} : memref<64x128xbf16, #tpu.memory_space<vmem>>, vector<64x128xbf16>,
      %cst_62 = arith.constant 0.000000e+00 : f32
      %71 = vector.broadcast %cst_62 : f32 to vector<64x128xf32>
      %c0_63 = arith.constant 0 : index
      %c0_64 = arith.constant 0 : index
      %72 = vector.load %arg9[%c0_63, %c0_64] : memref<64x128xf32, #tpu.memory_space<vmem>>, vector<64x128xf32>
      tpu.vector_store %arg9[%c0_63, %c0_64], %71 {strides = array<i32>} : memref<64x128xf32, #tpu.memory_space<vmem>>, vector<64x128xf32>,
      %cst_65 = arith.constant 0.000000e+00 : f32
      %73 = vector.broadcast %cst_65 : f32 to vector<64x128xf32>
      %c0_66 = arith.constant 0 : index
      %c0_67 = arith.constant 0 : index
      %74 = vector.load %arg10[%c0_66, %c0_67] : memref<64x128xf32, #tpu.memory_space<vmem>>, vector<64x128xf32>
      tpu.vector_store %arg10[%c0_66, %c0_67], %73 {strides = array<i32>} : memref<64x128xf32, #tpu.memory_space<vmem>>, vector<64x128xf32>,
    } else {
    }
    %c1_i32_42 = arith.constant 1 : i32
    %48 = arith.cmpi eq, %arg0, %c1_i32_42 : i32
    %c1_i32_43 = arith.constant 1 : i32
    %49 = arith.cmpi eq, %arg1, %c1_i32_43 : i32
    %50 = arith.andi %48, %49 : i1
    %51 = arith.extui %50 : i1 to i32
    %c0_i32_44 = arith.constant 0 : i32
    %52 = arith.cmpi ne, %51, %c0_i32_44 : i32
    scf.if %52 {
      %c0_45 = arith.constant 0 : index
      %c0_46 = arith.constant 0 : index
      %c0_47 = arith.constant 0 : index
      %53 = vector.load %arg8[%c0_45, %c0_46, %c0_47] : memref<1x1x128xf32, #tpu.memory_space<vmem>>, vector<1x1x128xf32>
      %54 = vector.shape_cast %53 : vector<1x1x128xf32> to vector<1x128xf32>
      %c0_48 = arith.constant 0 : index
      %c0_49 = arith.constant 0 : index
      %55 = vector.load %arg9[%c0_48, %c0_49] : memref<64x128xf32, #tpu.memory_space<vmem>>, vector<64x128xf32>
      %56 = vector.broadcast %54 : vector<1x128xf32> to vector<64x128xf32>
      %57 = arith.addf %55, %56 : vector<64x128xf32>
      %cst_50 = arith.constant 0.000000e+00 : f32
      %58 = vector.broadcast %cst_50 : f32 to vector<64x128xf32>
      %59 = arith.maximumf %57, %58 : vector<64x128xf32>
      %c0_51 = arith.constant 0 : index
      %c0_52 = arith.constant 0 : index
      %60 = vector.load %arg9[%c0_51, %c0_52] : memref<64x128xf32, #tpu.memory_space<vmem>>, vector<64x128xf32>
      tpu.vector_store %arg9[%c0_51, %c0_52], %59 {strides = array<i32>} : memref<64x128xf32, #tpu.memory_space<vmem>>, vector<64x128xf32>,
      %c0_53 = arith.constant 0 : index
      %c0_54 = arith.constant 0 : index
      %61 = vector.load %arg10[%c0_53, %c0_54] : memref<64x128xf32, #tpu.memory_space<vmem>>, vector<64x128xf32>
      %62 = vector.broadcast %54 : vector<1x128xf32> to vector<64x128xf32>
      %63 = arith.addf %61, %62 : vector<64x128xf32>
      %cst_55 = arith.constant 0.000000e+00 : f32
      %64 = vector.broadcast %cst_55 : f32 to vector<64x128xf32>
      %65 = arith.maximumf %63, %64 : vector<64x128xf32>
      %c0_56 = arith.constant 0 : index
      %c0_57 = arith.constant 0 : index
      %66 = vector.load %arg10[%c0_56, %c0_57] : memref<64x128xf32, #tpu.memory_space<vmem>>, vector<64x128xf32>
      tpu.vector_store %arg10[%c0_56, %c0_57], %65 {strides = array<i32>} : memref<64x128xf32, #tpu.memory_space<vmem>>, vector<64x128xf32>,
    } else {
    }
    return
  }
  func.func @transform_0(%arg0: i32, %arg1: i32) -> (i32, i32) {
    %c0_i32 = arith.constant 0 : i32
    %c0_i32_0 = arith.constant 0 : i32
    %c0_i32_1 = arith.constant 0 : i32
    return %c0_i32, %c0_i32_0 : i32, i32
  }
  func.func @transform_1(%arg0: i32, %arg1: i32) -> (i32, i32) {
    %c0_i32 = arith.constant 0 : i32
    %c0_i32_0 = arith.constant 0 : i32
    %c0_i32_1 = arith.constant 0 : i32
    return %c0_i32, %c0_i32_0 : i32, i32
  }
  func.func @transform_2(%arg0: i32, %arg1: i32) -> (i32, i32) {
    %c0_i32 = arith.constant 0 : i32
    %c0_i32_0 = arith.constant 0 : i32
    %c0_i32_1 = arith.constant 0 : i32
    return %c0_i32, %c0_i32_0 : i32, i32
  }
  func.func @transform_3(%arg0: i32, %arg1: i32) -> (i32, i32) {
    %c0_i32 = arith.constant 0 : i32
    %c0_i32_0 = arith.constant 0 : i32
    %c0_i32_1 = arith.constant 0 : i32
    return %c0_i32, %c0_i32_0 : i32, i32
  }
  func.func @transform_4(%arg0: i32, %arg1: i32) -> (i32, i32, i32) {
    %c0_i32 = arith.constant 0 : i32
    %c0_i32_0 = arith.constant 0 : i32
    %c0_i32_1 = arith.constant 0 : i32
    return %arg0, %c0_i32, %c0_i32_0 : i32, i32, i32
  }
  func.func @transform_5(%arg0: i32, %arg1: i32) -> (i32, i32, i32) {
    %c0_i32 = arith.constant 0 : i32
    %c0_i32_0 = arith.constant 0 : i32
    %c0_i32_1 = arith.constant 0 : i32
    return %arg0, %c0_i32, %c0_i32_0 : i32, i32, i32
  }
  func.func @transform_6(%arg0: i32, %arg1: i32) -> (i32, i32, i32) {
    %c0_i32 = arith.constant 0 : i32
    %c0_i32_0 = arith.constant 0 : i32
    %c0_i32_1 = arith.constant 0 : i32
    return %arg0, %c0_i32, %c0_i32_0 : i32, i32, i32
  }
  func.func @transform_7(%arg0: i32, %arg1: i32) -> (i32, i32) {
    %c0_i32 = arith.constant 0 : i32
    %c0_i32_0 = arith.constant 0 : i32
    %c0_i32_1 = arith.constant 0 : i32
    return %c0_i32, %c0_i32_0 : i32, i32
  }
  func.func @transform_8(%arg0: i32, %arg1: i32) -> (i32, i32) {
    %c0_i32 = arith.constant 0 : i32
    %c0_i32_0 = arith.constant 0 : i32
    %c0_i32_1 = arith.constant 0 : i32
    return %c0_i32, %c0_i32_0 : i32, i32
  }
}

</mosaic_0001>

<llo_original>
// kernel: layers_forward.1
$region0: #{layers_forward.1}
  #allocation0 [shape = 'u32[]', space=smem, size = 0x4, offset = 0x4, fixed_abs, tag = 'smem constant byte address 0x4 - core index']
  #allocation1 [shape = 'u32[144,128]{1,0:T(1,128)}', space=vmem, size = 0x12000, scoped, tag = 'internal scratch']
  #allocation2 [shape = 'f32[64,128]{1,0:T(8,128)}', space=vmem, size = 0x8000, scoped, tag = 'scratch operand']
  #allocation3 [shape = 'f32[64,128]{1,0:T(8,128)}', space=vmem, size = 0x8000, scoped, tag = 'scratch operand']
  #allocation4 [shape = 'bf16[64,128]{1,0:T(16,128)(2,1)}', space=vmem, size = 0x4000, scoped, tag = 'scratch operand']
  #allocation5 [shape = 'bf16[64,128]{1,0:T(16,128)(2,1)}', space=vmem, size = 0x4000, scoped, tag = 'scratch operand']
  %s0 = inlined_call_operand.vmem [shape: bf16[64,64], index: 0, kind: input, shape index: {}]
  %s1 = inlined_call_operand.vmem [shape: bf16[64,64], index: 1, kind: input, shape index: {}]
  %s2 = inlined_call_operand.vmem [shape: f32[64,128], index: 2, kind: input, shape index: {}]
  %s3 = inlined_call_operand.vmem [shape: f32[64,128], index: 3, kind: input, shape index: {}]
  %s4 = inlined_call_operand.vmem [shape: bf16[2,128,128], index: 4, kind: input, shape index: {}]
  %s5 = inlined_call_operand.vmem [shape: bf16[2,128,128], index: 5, kind: input, shape index: {}]
  %s6 = inlined_call_operand.vmem [shape: f32[2,1,128], index: 6, kind: input, shape index: {}]
  %s7 = inlined_call_operand.vmem [shape: f32[64,128], index: 7, kind: output, shape index: {0}]
  %s8 = inlined_call_operand.vmem [shape: f32[64,128], index: 8, kind: output, shape index: {1}]
  %9 = xla_tuple %s7, %s8
  %s10 = sld [smem:[#allocation0]]
  $region81: #{layers_forward.1} parent=0
    _
  %s12 = ssub.s32 1, %s10
  %s13 = scalar_select 0, %s12, %s10
  loop: start=0, step=1, limit=6
  $region2: #{layers_forward.1} parent=0 // loop_pre_header
    _
  $region3: #{layers_forward.1} parent=0 // loop_header
    %s15 = sphi 0, %s19
    %p16 = scmp.ge.s32.totalorder %s15, 6
    %s22 = sphi 0, %s34
    %s23 = sphi 0, %s30
    %s24 = sphi 0, %s22
    %s25 = sphi 0, %s23
    %s26 = sphi 0, %s24
    %s27 = sphi 0, %s25
    %s35 = sphi 0, %s35
    %s37 = sphi 0, %s35
    %s38 = sphi 0, %s37
    %s52 = sphi 0, %s38
    %s56 = sphi 0, %s56
    %s58 = sphi 0, %s56
    %s59 = sphi 0, %s58
    %s73 = sphi 0, %s59
    %s77 = sphi 0, %s77
    %s79 = sphi 0, %s77
    %s80 = sphi 0, %s79
    %s94 = sphi 0, %s80
    %s98 = sphi 0, %s98
    %s100 = sphi 0, %s98
    %s101 = sphi 0, %s100
    %s115 = sphi 0, %s101
    %s121 = sphi 0, %s123
    %s124 = sphi 0, %s121
    %s125 = sphi 0, %s124
    %s141 = sphi 0, %s125
    %s147 = sphi 0, %s149
    %s150 = sphi 0, %s147
    %s151 = sphi 0, %s150
    %s167 = sphi 0, %s151
    %s173 = sphi 0, %s175
    %s176 = sphi 0, %s173
    %s177 = sphi 0, %s176
    %s193 = sphi 0, %s177
    %s197 = sphi 0, %s197
    %s199 = sphi 0, %s197
    %s200 = sphi 0, %s199
    %s214 = sphi 0, %s200
    %s218 = sphi 0, %s218
    %s220 = sphi 0, %s218
    %s221 = sphi 0, %s220
    %s235 = sphi 0, %s221
  $region4: #{layers_forward.1} parent=0 // loop_header_branch
    %18 = sbr.rel (%p16) target = $region8
  $region5: #{layers_forward.1} parent=0 // loop_body
    %s20 = ssub.s32 %s15, 1
    %s21 = ssub.s32 %s15, 2
    %s28 = sadd.s32 1, %s23
    %p29 = scmp.ge.s32.totalorder %s28, 2
    %s30 = scalar_select %p29, 0, %s28
    %s31 = sadd.s32 1, %s22
    %s32 = scalar_select %p29, %s31, %s22
    %p33 = scmp.ge.s32.totalorder %s32, 2
    %s34 = scalar_select %p33, 0, %s32
    %s36 = sadd.s32 %s35, 1
    %p39 = scmp.eq.s32.totalorder %s15, 3
    %p40 = scmp.ne.s32.totalorder %s35, %s37
    %p41 = scmp.eq.s32.totalorder %s15, 0
    %p42 = por %p40, %p41
    %p43 = scmp.ne.s32.totalorder %s35, %s37
    %p44 = scmp.eq.s32.totalorder %s20, 3
    %p45 = por %p43, %p44
    %p46 = scmp.ne.s32.totalorder %s37, %s38
    %p47 = scmp.eq.s32.totalorder %s20, 0
    %p48 = por %p46, %p47
    %p49 = scmp.ne.s32.totalorder %s37, %s38
    %p50 = scmp.eq.s32.totalorder %s21, 3
    %p51 = por %p49, %p50
    %p53 = scmp.ne.s32.totalorder %s38, %s52
    %p54 = scmp.eq.s32.totalorder %s21, 0
    %p55 = por %p53, %p54
    %s57 = sadd.s32 %s56, 1
    %p60 = scmp.eq.s32.totalorder %s15, 3
    %p61 = scmp.ne.s32.totalorder %s56, %s58
    %p62 = scmp.eq.s32.totalorder %s15, 0
    %p63 = por %p61, %p62
    %p64 = scmp.ne.s32.totalorder %s56, %s58
    %p65 = scmp.eq.s32.totalorder %s20, 3
    %p66 = por %p64, %p65
    %p67 = scmp.ne.s32.totalorder %s58, %s59
    %p68 = scmp.eq.s32.totalorder %s20, 0
    %p69 = por %p67, %p68
    %p70 = scmp.ne.s32.totalorder %s58, %s59
    %p71 = scmp.eq.s32.totalorder %s21, 3
    %p72 = por %p70, %p71
    %p74 = scmp.ne.s32.totalorder %s59, %s73
    %p75 = scmp.eq.s32.totalorder %s21, 0
    %p76 = por %p74, %p75
    %s78 = sadd.s32 %s77, 1
    %p81 = scmp.eq.s32.totalorder %s15, 3
    %p82 = scmp.ne.s32.totalorder %s77, %s79
    %p83 = scmp.eq.s32.totalorder %s15, 0
    %p84 = por %p82, %p83
    %p85 = scmp.ne.s32.totalorder %s77, %s79
    %p86 = scmp.eq.s32.totalorder %s20, 3
    %p87 = por %p85, %p86
    %p88 = scmp.ne.s32.totalorder %s79, %s80
    %p89 = scmp.eq.s32.totalorder %s20, 0
    %p90 = por %p88, %p89
    %p91 = scmp.ne.s32.totalorder %s79, %s80
    %p92 = scmp.eq.s32.totalorder %s21, 3
    %p93 = por %p91, %p92
    %p95 = scmp.ne.s32.totalorder %s80, %s94
    %p96 = scmp.eq.s32.totalorder %s21, 0
    %p97 = por %p95, %p96
    %s99 = sadd.s32 %s98, 1
    %p102 = scmp.eq.s32.totalorder %s15, 3
    %p103 = scmp.ne.s32.totalorder %s98, %s100
    %p104 = scmp.eq.s32.totalorder %s15, 0
    %p105 = por %p103, %p104
    %p106 = scmp.ne.s32.totalorder %s98, %s100
    %p107 = scmp.eq.s32.totalorder %s20, 3
    %p108 = por %p106, %p107
    %p109 = scmp.ne.s32.totalorder %s100, %s101
    %p110 = scmp.eq.s32.totalorder %s20, 0
    %p111 = por %p109, %p110
    %p112 = scmp.ne.s32.totalorder %s100, %s101
    %p113 = scmp.eq.s32.totalorder %s21, 3
    %p114 = por %p112, %p113
    %p116 = scmp.ne.s32.totalorder %s101, %s115
    %p117 = scmp.eq.s32.totalorder %s21, 0
    %p118 = por %p116, %p117
    %s119 = ssub.s32 %s22, %s34
    %p120 = scmp.eq.s32.totalorder %s119, 0
    %s122 = sadd.s32 %s121, 1
    %s123 = scalar_select %p120, %s121, %s122
    %p126 = pneg %p120
    %p127 = scmp.eq.s32.totalorder %s15, 3
    %p128 = por %p126, %p127
    %p129 = scmp.ne.s32.totalorder %s121, %s124
    %p130 = scmp.eq.s32.totalorder %s15, 0
    %p131 = por %p129, %p130
    %p132 = scmp.ne.s32.totalorder %s121, %s124
    %p133 = scmp.eq.s32.totalorder %s20, 3
    %p134 = por %p132, %p133
    %p135 = scmp.ne.s32.totalorder %s124, %s125
    %p136 = scmp.eq.s32.totalorder %s20, 0
    %p137 = por %p135, %p136
    %p138 = scmp.ne.s32.totalorder %s124, %s125
    %p139 = scmp.eq.s32.totalorder %s21, 3
    %p140 = por %p138, %p139
    %p142 = scmp.ne.s32.totalorder %s125, %s141
    %p143 = scmp.eq.s32.totalorder %s21, 0
    %p144 = por %p142, %p143
    %s145 = ssub.s32 %s22, %s34
    %p146 = scmp.eq.s32.totalorder %s145, 0
    %s148 = sadd.s32 %s147, 1
    %s149 = scalar_select %p146, %s147, %s148
    %p152 = pneg %p146
    %p153 = scmp.eq.s32.totalorder %s15, 3
    %p154 = por %p152, %p153
    %p155 = scmp.ne.s32.totalorder %s147, %s150
    %p156 = scmp.eq.s32.totalorder %s15, 0
    %p157 = por %p155, %p156
    %p158 = scmp.ne.s32.totalorder %s147, %s150
    %p159 = scmp.eq.s32.totalorder %s20, 3
    %p160 = por %p158, %p159
    %p161 = scmp.ne.s32.totalorder %s150, %s151
    %p162 = scmp.eq.s32.totalorder %s20, 0
    %p163 = por %p161, %p162
    %p164 = scmp.ne.s32.totalorder %s150, %s151
    %p165 = scmp.eq.s32.totalorder %s21, 3
    %p166 = por %p164, %p165
    %p168 = scmp.ne.s32.totalorder %s151, %s167
    %p169 = scmp.eq.s32.totalorder %s21, 0
    %p170 = por %p168, %p169
    %s171 = ssub.s32 %s22, %s34
    %p172 = scmp.eq.s32.totalorder %s171, 0
    %s174 = sadd.s32 %s173, 1
    %s175 = scalar_select %p172, %s173, %s174
    %p178 = pneg %p172
    %p179 = scmp.eq.s32.totalorder %s15, 3
    %p180 = por %p178, %p179
    %p181 = scmp.ne.s32.totalorder %s173, %s176
    %p182 = scmp.eq.s32.totalorder %s15, 0
    %p183 = por %p181, %p182
    %p184 = scmp.ne.s32.totalorder %s173, %s176
    %p185 = scmp.eq.s32.totalorder %s20, 3
    %p186 = por %p184, %p185
    %p187 = scmp.ne.s32.totalorder %s176, %s177
    %p188 = scmp.eq.s32.totalorder %s20, 0
    %p189 = por %p187, %p188
    %p190 = scmp.ne.s32.totalorder %s176, %s177
    %p191 = scmp.eq.s32.totalorder %s21, 3
    %p192 = por %p190, %p191
    %p194 = scmp.ne.s32.totalorder %s177, %s193
    %p195 = scmp.eq.s32.totalorder %s21, 0
    %p196 = por %p194, %p195
    %s198 = sadd.s32 %s197, 1
    %p201 = scmp.eq.s32.totalorder %s15, 3
    %p202 = scmp.ne.s32.totalorder %s197, %s199
    %p203 = scmp.eq.s32.totalorder %s15, 0
    %p204 = por %p202, %p203
    %p205 = scmp.ne.s32.totalorder %s197, %s199
    %p206 = scmp.eq.s32.totalorder %s20, 3
    %p207 = por %p205, %p206
    %p208 = scmp.ne.s32.totalorder %s199, %s200
    %p209 = scmp.eq.s32.totalorder %s20, 0
    %p210 = por %p208, %p209
    %p211 = scmp.ne.s32.totalorder %s199, %s200
    %p212 = scmp.eq.s32.totalorder %s21, 3
    %p213 = por %p211, %p212
    %p215 = scmp.ne.s32.totalorder %s200, %s214
    %p216 = scmp.eq.s32.totalorder %s21, 0
    %p217 = por %p215, %p216
    %s219 = sadd.s32 %s218, 1
    %p222 = scmp.eq.s32.totalorder %s15, 3
    %p223 = scmp.ne.s32.totalorder %s218, %s220
    %p224 = scmp.eq.s32.totalorder %s15, 0
    %p225 = por %p223, %p224
    %p226 = scmp.ne.s32.totalorder %s218, %s220
    %p227 = scmp.eq.s32.totalorder %s20, 3
    %p228 = por %p226, %p227
    %p229 = scmp.ne.s32.totalorder %s220, %s221
    %p230 = scmp.eq.s32.totalorder %s20, 0
    %p231 = por %p229, %p230
    %p232 = scmp.ne.s32.totalorder %s220, %s221
    %p233 = scmp.eq.s32.totalorder %s21, 3
    %p234 = por %p232, %p233
    %p236 = scmp.ne.s32.totalorder %s221, %s235
    %p237 = scmp.eq.s32.totalorder %s21, 0
    %p238 = por %p236, %p237
    %p239 = scmp.le.s32.totalorder 1, %s15
    %p240 = scmp.lt.s32.totalorder %s15, 5
    %p241 = pnand %p239, %p240
    %p242 = pneg %p241
    // Predicated region
    $region9: #{layers_forward.1} parent=5 // pred_check
      _
    $region10: #{layers_forward.1} parent=5 // pred_check_branch
      %244 = sbr.rel (%p241) target = $region12
    $region11: #{layers_forward.1} parent=5 // pred_region
      %s245 = ssub.s32 %s15, 1
      // Predicated region
      $region13: #{layers_forward.1} parent=11 // pred_check
        %p246 = pneg %p48
      $region14: #{layers_forward.1} parent=11 // pred_check_branch
        %248 = sbr.rel (%p246) target = $region16
      $region15: #{layers_forward.1} parent=11 // pred_region
        _
      $region16: #{layers_forward.1} parent=11 // pred_fallthru
        _
      // Predicated region
      $region17: #{layers_forward.1} parent=11 // pred_check
        %p249 = pneg %p69
      $region18: #{layers_forward.1} parent=11 // pred_check_branch
        %251 = sbr.rel (%p249) target = $region20
      $region19: #{layers_forward.1} parent=11 // pred_region
        _
      $region20: #{layers_forward.1} parent=11 // pred_fallthru
        _
      // Predicated region
      $region21: #{layers_forward.1} parent=11 // pred_check
        %p252 = pneg %p90
      $region22: #{layers_forward.1} parent=11 // pred_check_branch
        %254 = sbr.rel (%p252) target = $region24
      $region23: #{layers_forward.1} parent=11 // pred_region
        _
      $region24: #{layers_forward.1} parent=11 // pred_fallthru
        _
      // Predicated region
      $region25: #{layers_forward.1} parent=11 // pred_check
        %p255 = pneg %p111
      $region26: #{layers_forward.1} parent=11 // pred_check_branch
        %257 = sbr.rel (%p255) target = $region28
      $region27: #{layers_forward.1} parent=11 // pred_region
        _
      $region28: #{layers_forward.1} parent=11 // pred_fallthru
        _
    $region12: #{layers_forward.1} parent=5 // pred_fallthru
      _
    %p258 = scmp.lt.s32.totalorder %s15, 4
    // Predicated region
    $region29: #{layers_forward.1} parent=5 // pred_check
      %p259 = pneg %p258
    $region30: #{layers_forward.1} parent=5 // pred_check_branch
      %261 = sbr.rel (%p259) target = $region32
    $region31: #{layers_forward.1} parent=5 // pred_region
      // Predicated region
      $region33: #{layers_forward.1} parent=31 // pred_check
        %p262 = pneg %p131
      $region34: #{layers_forward.1} parent=31 // pred_check_branch
        %264 = sbr.rel (%p262) target = $region36
      $region35: #{layers_forward.1} parent=31 // pred_region
        %p265 = scmp.lt.s32.totalorder %s22, 1
        %s266 = scalar_select %p265, %s22, 1
        %s267 = smul.addr %s266, 16
        %s268 = smul.addr %s267, 4
        %s269 = scalar_lea.vmem %s4, %s268
      $region36: #{layers_forward.1} parent=31 // pred_fallthru
        _
      // Predicated region
      $region37: #{layers_forward.1} parent=31 // pred_check
        %p270 = pneg %p157
      $region38: #{layers_forward.1} parent=31 // pred_check_branch
        %272 = sbr.rel (%p270) target = $region40
      $region39: #{layers_forward.1} parent=31 // pred_region
        %p273 = scmp.lt.s32.totalorder %s22, 1
        %s274 = scalar_select %p273, %s22, 1
        %s275 = smul.addr %s274, 16
        %s276 = smul.addr %s275, 4
        %s277 = scalar_lea.vmem %s5, %s276
      $region40: #{layers_forward.1} parent=31 // pred_fallthru
        _
      // Predicated region
      $region41: #{layers_forward.1} parent=31 // pred_check
        %p278 = pneg %p183
      $region42: #{layers_forward.1} parent=31 // pred_check_branch
        %280 = sbr.rel (%p278) target = $region44
      $region43: #{layers_forward.1} parent=31 // pred_region
        %p281 = scmp.lt.s32.totalorder %s22, 1
        %s282 = scalar_select %p281, %s22, 1
        %s283 = scalar_lea.vmem %s6, %s282
      $region44: #{layers_forward.1} parent=31 // pred_fallthru
        _
    $region32: #{layers_forward.1} parent=5 // pred_fallthru
      _
    %p284 = scmp.le.s32.totalorder 1, %s15
    %p285 = scmp.lt.s32.totalorder %s15, 5
    %p286 = pnand %p284, %p285
    %p287 = pneg %p286
    // Predicated region
    $region45: #{layers_forward.1} parent=5 // pred_check
      _
    $region46: #{layers_forward.1} parent=5 // pred_check_branch
      %289 = sbr.rel (%p286) target = $region48
    $region47: #{layers_forward.1} parent=5 // pred_region
      %s290 = ssub.s32 %s15, 1
      %p291 = pneg %p48
      %p292 = pneg %p45
      %p293 = pneg %p69
      %p294 = pneg %p66
      %p295 = pneg %p90
      %p296 = pneg %p87
      %p297 = pneg %p111
      %p298 = pneg %p108
      %p299 = scmp.lt.s32.totalorder %s24, 1
      %s300 = scalar_select %p299, %s24, 1
      %s301 = smul.addr %s300, 16
      %s302 = smul.addr %s301, 4
      %s303 = scalar_lea.vmem %s4, %s302
      %p304 = pneg %p137
      %p305 = pneg %p134
      %p306 = scmp.lt.s32.totalorder %s24, 1
      %s307 = scalar_select %p306, %s24, 1
      %s308 = smul.addr %s307, 16
      %s309 = smul.addr %s308, 4
      %s310 = scalar_lea.vmem %s5, %s309
      %p311 = pneg %p163
      %p312 = pneg %p160
      %p313 = scmp.lt.s32.totalorder %s24, 1
      %s314 = scalar_select %p313, %s24, 1
      %s315 = scalar_lea.vmem %s6, %s314
      %p316 = pneg %p189
      %p317 = pneg %p186
      %p318 = pneg %p210
      %p319 = pneg %p207
      %p320 = pneg %p231
      %p321 = pneg %p228
      %p322 = scmp.lt.s32.totalorder %s24, 1
      %s323 = scalar_select %p322, %s24, 1
      %s324 = smul.addr %s323, 16
      %s325 = smul.addr %s324, 4
      %s326 = scalar_lea.vmem %s4, %s325
      %p327 = scmp.lt.s32.totalorder %s24, 1
      %s328 = scalar_select %p327, %s24, 1
      %s329 = smul.addr %s328, 16
      %s330 = smul.addr %s329, 4
      %s331 = scalar_lea.vmem %s5, %s330
      %p332 = scmp.lt.s32.totalorder %s24, 1
      %s333 = scalar_select %p332, %s24, 1
      %s334 = scalar_lea.vmem %s6, %s333
      %p336 = scmp.eq.s32.totalorder %s24, 0
      %p337 = scmp.eq.s32.totalorder %s25, 0
      %p338 = pnand %p336, %p337
      %p339 = pneg %p338
      // Predicated region
      $region49: #{layers_forward.1} parent=47 // pred_check
        _
      $region50: #{layers_forward.1} parent=47 // pred_check_branch
        %341 = sbr.rel (%p338) target = $region52
      $region51: #{layers_forward.1} parent=47 // pred_region
        %v342 = vld [vmem:[%s2] sm:$0xff]
        %v343 = vld [vmem:[%s2 + $0x8] sm:$0xff]
        %v344 = vld [vmem:[%s2 + $0x10] sm:$0xff]
        %v345 = vld [vmem:[%s2 + $0x18] sm:$0xff]
        %v346 = vld [vmem:[%s2 + $0x20] sm:$0xff]
        %v347 = vld [vmem:[%s2 + $0x28] sm:$0xff]
        %v348 = vld [vmem:[%s2 + $0x30] sm:$0xff]
        %v349 = vld [vmem:[%s2 + $0x38] sm:$0xff]
        %v350 = vld [vmem:[%s3] sm:$0xff]
        %v351 = vld [vmem:[%s3 + $0x8] sm:$0xff]
        %v352 = vld [vmem:[%s3 + $0x10] sm:$0xff]
        %v353 = vld [vmem:[%s3 + $0x18] sm:$0xff]
        %v354 = vld [vmem:[%s3 + $0x20] sm:$0xff]
        %v355 = vld [vmem:[%s3 + $0x28] sm:$0xff]
        %v356 = vld [vmem:[%s3 + $0x30] sm:$0xff]
        %v357 = vld [vmem:[%s3 + $0x38] sm:$0xff]
        %358 = vst [vmem:[#allocation2] sm:$0xff] %v342
        %359 = vst [vmem:[#allocation2 + $0x8] sm:$0xff] %v343
        %360 = vst [vmem:[#allocation2 + $0x10] sm:$0xff] %v344
        %361 = vst [vmem:[#allocation2 + $0x18] sm:$0xff] %v345
        %362 = vst [vmem:[#allocation2 + $0x20] sm:$0xff] %v346
        %363 = vst [vmem:[#allocation2 + $0x28] sm:$0xff] %v347
        %364 = vst [vmem:[#allocation2 + $0x30] sm:$0xff] %v348
        %365 = vst [vmem:[#allocation2 + $0x38] sm:$0xff] %v349
        %366 = vst [vmem:[#allocation3] sm:$0xff] %v350
        %367 = vst [vmem:[#allocation3 + $0x8] sm:$0xff] %v351
        %368 = vst [vmem:[#allocation3 + $0x10] sm:$0xff] %v352
        %369 = vst [vmem:[#allocation3 + $0x18] sm:$0xff] %v353
        %370 = vst [vmem:[#allocation3 + $0x20] sm:$0xff] %v354
        %371 = vst [vmem:[#allocation3 + $0x28] sm:$0xff] %v355
        %372 = vst [vmem:[#allocation3 + $0x30] sm:$0xff] %v356
        %373 = vst [vmem:[#allocation3 + $0x38] sm:$0xff] %v357
        %v374 = vpack.c.bf16 %v343, %v342
        %v375 = vpack.c.bf16 %v345, %v344
        %v376 = vpack.c.bf16 %v347, %v346
        %v377 = vpack.c.bf16 %v349, %v348
        %378 = vst [vmem:[#allocation4] sm:$0xff] %v374
        %379 = vst [vmem:[#allocation4 + $0x8] sm:$0xff] %v375
        %380 = vst [vmem:[#allocation4 + $0x10] sm:$0xff] %v376
        %381 = vst [vmem:[#allocation4 + $0x18] sm:$0xff] %v377
        %v382 = vpack.c.bf16 %v351, %v350
        %v383 = vpack.c.bf16 %v353, %v352
        %v384 = vpack.c.bf16 %v355, %v354
        %v385 = vpack.c.bf16 %v357, %v356
        %386 = vst [vmem:[#allocation5] sm:$0xff] %v382
        %387 = vst [vmem:[#allocation5 + $0x8] sm:$0xff] %v383
        %388 = vst [vmem:[#allocation5 + $0x10] sm:$0xff] %v384
        %389 = vst [vmem:[#allocation5 + $0x18] sm:$0xff] %v385
        %390 = vst [vmem:[%s7] sm:$0xff] 0.0
        %391 = vst [vmem:[%s7 + $0x8] sm:$0xff] 0.0
        %392 = vst [vmem:[%s7 + $0x10] sm:$0xff] 0.0
        %393 = vst [vmem:[%s7 + $0x18] sm:$0xff] 0.0
        %394 = vst [vmem:[%s7 + $0x20] sm:$0xff] 0.0
        %395 = vst [vmem:[%s7 + $0x28] sm:$0xff] 0.0
        %396 = vst [vmem:[%s7 + $0x30] sm:$0xff] 0.0
        %397 = vst [vmem:[%s7 + $0x38] sm:$0xff] 0.0
        %398 = vst [vmem:[%s8] sm:$0xff] 0.0
        %399 = vst [vmem:[%s8 + $0x8] sm:$0xff] 0.0
        %400 = vst [vmem:[%s8 + $0x10] sm:$0xff] 0.0
        %401 = vst [vmem:[%s8 + $0x18] sm:$0xff] 0.0
        %402 = vst [vmem:[%s8 + $0x20] sm:$0xff] 0.0
        %403 = vst [vmem:[%s8 + $0x28] sm:$0xff] 0.0
        %404 = vst [vmem:[%s8 + $0x30] sm:$0xff] 0.0
        %405 = vst [vmem:[%s8 + $0x38] sm:$0xff] 0.0
      $region52: #{layers_forward.1} parent=47 // pred_fallthru
        _
      %v406 = vld [vmem:[%s0] sm:$0xf]
      %v407 = vld [vmem:[%s0 + $0x4] sm:$0xf]
      %v408 = vld [vmem:[%s0 + $0x8] sm:$0xf]
      %v409 = vld [vmem:[%s0 + $0xc] sm:$0xf]
      %v410 = vld [vmem:[%s0 + $0x10] sm:$0xf]
      %v411 = vld [vmem:[%s0 + $0x14] sm:$0xf]
      %v412 = vld [vmem:[%s0 + $0x18] sm:$0xf]
      %v413 = vld [vmem:[%s0 + $0x1c] sm:$0xf]
      %v414 = vld [vmem:[#allocation5] sm:$0xff]
      %v415 = vld [vmem:[#allocation5 + $0x8] sm:$0xff]
      %v416 = vld [vmem:[#allocation5 + $0x10] sm:$0xff]
      %v417 = vld [vmem:[#allocation5 + $0x18] sm:$0xff]
      %v426 = vunpack.c.l.b16 %v406
      %v427 = vunpack.c.l.b16 %v407
      %v428 = vunpack.c.l.b16 %v408
      %v429 = vunpack.c.l.b16 %v409
      %v430 = vunpack.c.l.b16 %v410
      %v431 = vunpack.c.l.b16 %v411
      %v432 = vunpack.c.l.b16 %v412
      %v433 = vunpack.c.l.b16 %v413
      %v434 = vpack.c.b16 %v427, %v426
      %v435 = vpack.c.b16 %v429, %v428
      %v436 = vpack.c.b16 %v431, %v430
      %v437 = vpack.c.b16 %v433, %v432
      %vm438 = vcmask 523264
      %v440 = vsel %vm438, %v434, 0
      %v443 = vsel %vm438, %v435, 0
      %v446 = vsel %vm438, %v436, 0
      %v449 = vsel %vm438, %v437, 0
      %451 = vmatprep.subr.bf16.mxu0 0
      %452 = vmatpush1.bf16.msra.mxu0 %v414
      %453 = vmatprep.subr.bf16.mxu0 0
      %454 = vmatpush1.bf16.msra.mxu0 %v415
      %455 = vmatprep.subr.bf16.mxu0 0
      %456 = vmatpush1.bf16.msra.mxu0 %v416
      %457 = vmatprep.subr.bf16.mxu0 0
      %458 = vmatpush1.bf16.msra.mxu0 %v417
      %459 = vmatprep.subr.bf16.mxu0 0
      %460 = vmatpush1.bf16.msra.mxu0 0
      %461 = vmatprep.subr.bf16.mxu0 0
      %462 = vmatpush1.bf16.msra.mxu0 0
      %463 = vmatprep.subr.bf16.mxu0 0
      %464 = vmatpush1.bf16.msra.mxu0 0
      %465 = vmatprep.subr.bf16.mxu0 0
      %466 = vmatpush1.bf16.msra.mxu0 0
      %467 = vmatprep.subr.bf16.mxu0 0
      %468 = vmatpush1.bf16.msra.mxu0 0
      %469 = vmatprep.subr.bf16.mxu0 0
      %470 = vmatpush1.bf16.msra.mxu0 0
      %471 = vmatprep.subr.bf16.mxu0 0
      %472 = vmatpush1.bf16.msra.mxu0 0
      %473 = vmatprep.subr.bf16.mxu0 0
      %474 = vmatpush1.bf16.msra.mxu0 0
      %475 = vmatprep.subr.bf16.mxu0 0
      %476 = vmatpush1.bf16.msra.mxu0 0
      %477 = vmatprep.subr.bf16.mxu0 0
      %478 = vmatpush1.bf16.msra.mxu0 0
      %479 = vmatprep.subr.bf16.mxu0 0
      %480 = vmatpush1.bf16.msra.mxu0 0
      %481 = vmatprep.subr.bf16.mxu0 0
      %482 = vmatpush1.bf16.msra.mxu0 0
      %483 = vmatprep.mubr.bf16.mxu0 0
      %484 = vmatmul.mubr.bf16.gmra.mrb[0].mxu0 %v440
      %v485 = vpop.f32.mrb[0].mxu0
      %v486 = vadd.f32 0.0, %v485
      %v487 = vpop.f32.mrb[0].mxu0
      %v488 = vpop.f32.mrb[0].mxu0
      %v489 = vadd.f32 0.0, %v488
      %v490 = vpop.f32.mrb[0].mxu0
      %491 = vmatprep.mubr.bf16.mxu0 0
      %492 = vmatmul.mubr.bf16.gmra.mrb[0].mxu0 %v443
      %v493 = vpop.f32.mrb[0].mxu0
      %v494 = vadd.f32 0.0, %v493
      %v495 = vpop.f32.mrb[0].mxu0
      %v496 = vpop.f32.mrb[0].mxu0
      %v497 = vadd.f32 0.0, %v496
      %v498 = vpop.f32.mrb[0].mxu0
      %499 = vmatprep.mubr.bf16.mxu0 0
      %500 = vmatmul.mubr.bf16.gmra.mrb[0].mxu0 %v446
      %v501 = vpop.f32.mrb[0].mxu0
      %v502 = vadd.f32 0.0, %v501
      %v503 = vpop.f32.mrb[0].mxu0
      %v504 = vpop.f32.mrb[0].mxu0
      %v505 = vadd.f32 0.0, %v504
      %v506 = vpop.f32.mrb[0].mxu0
      %507 = vmatprep.mubr.bf16.mxu0 0
      %508 = vmatmul.mubr.bf16.gmra.mrb[0].mxu0 %v449
      %v509 = vpop.f32.mrb[0].mxu0
      %v510 = vadd.f32 0.0, %v509
      %v511 = vpop.f32.mrb[0].mxu0
      %v512 = vpop.f32.mrb[0].mxu0
      %v513 = vadd.f32 0.0, %v512
      %v514 = vpop.f32.mrb[0].mxu0
      %515 = vdwg.mxu0
      %v516 = vld [vmem:[%s1] sm:$0xf]
      %v517 = vld [vmem:[%s1 + $0x4] sm:$0xf]
      %v518 = vld [vmem:[%s1 + $0x8] sm:$0xf]
      %v519 = vld [vmem:[%s1 + $0xc] sm:$0xf]
      %v520 = vld [vmem:[%s1 + $0x10] sm:$0xf]
      %v521 = vld [vmem:[%s1 + $0x14] sm:$0xf]
      %v522 = vld [vmem:[%s1 + $0x18] sm:$0xf]
      %v523 = vld [vmem:[%s1 + $0x1c] sm:$0xf]
      %v524 = vld [vmem:[#allocation4] sm:$0xff]
      %v525 = vld [vmem:[#allocation4 + $0x8] sm:$0xff]
      %v526 = vld [vmem:[#allocation4 + $0x10] sm:$0xff]
      %v527 = vld [vmem:[#allocation4 + $0x18] sm:$0xff]
      %v536 = vunpack.c.l.b16 %v516
      %v537 = vunpack.c.l.b16 %v517
      %v538 = vunpack.c.l.b16 %v518
      %v539 = vunpack.c.l.b16 %v519
      %v540 = vunpack.c.l.b16 %v520
      %v541 = vunpack.c.l.b16 %v521
      %v542 = vunpack.c.l.b16 %v522
      %v543 = vunpack.c.l.b16 %v523
      %v544 = vpack.c.b16 %v537, %v536
      %v545 = vpack.c.b16 %v539, %v538
      %v546 = vpack.c.b16 %v541, %v540
      %v547 = vpack.c.b16 %v543, %v542
      %v549 = vsel %vm438, %v544, 0
      %v552 = vsel %vm438, %v545, 0
      %v555 = vsel %vm438, %v546, 0
      %v558 = vsel %vm438, %v547, 0
      %560 = vmatprep.subr.bf16.mxu0 0
      %561 = vmatpush1.bf16.msra.mxu0 %v524
      %562 = vmatprep.subr.bf16.mxu0 0
      %563 = vmatpush1.bf16.msra.mxu0 %v525
      %564 = vmatprep.subr.bf16.mxu0 0
      %565 = vmatpush1.bf16.msra.mxu0 %v526
      %566 = vmatprep.subr.bf16.mxu0 0
      %567 = vmatpush1.bf16.msra.mxu0 %v527
      %568 = vmatprep.subr.bf16.mxu0 0
      %569 = vmatpush1.bf16.msra.mxu0 0
      %570 = vmatprep.subr.bf16.mxu0 0
      %571 = vmatpush1.bf16.msra.mxu0 0
      %572 = vmatprep.subr.bf16.mxu0 0
      %573 = vmatpush1.bf16.msra.mxu0 0
      %574 = vmatprep.subr.bf16.mxu0 0
      %575 = vmatpush1.bf16.msra.mxu0 0
      %576 = vmatprep.subr.bf16.mxu0 0
      %577 = vmatpush1.bf16.msra.mxu0 0
      %578 = vmatprep.subr.bf16.mxu0 0
      %579 = vmatpush1.bf16.msra.mxu0 0
      %580 = vmatprep.subr.bf16.mxu0 0
      %581 = vmatpush1.bf16.msra.mxu0 0
      %582 = vmatprep.subr.bf16.mxu0 0
      %583 = vmatpush1.bf16.msra.mxu0 0
      %584 = vmatprep.subr.bf16.mxu0 0
      %585 = vmatpush1.bf16.msra.mxu0 0
      %586 = vmatprep.subr.bf16.mxu0 0
      %587 = vmatpush1.bf16.msra.mxu0 0
      %588 = vmatprep.subr.bf16.mxu0 0
      %589 = vmatpush1.bf16.msra.mxu0 0
      %590 = vmatprep.subr.bf16.mxu0 0
      %591 = vmatpush1.bf16.msra.mxu0 0
      %592 = vmatprep.mubr.bf16.mxu0 0
      %593 = vmatmul.mubr.bf16.gmra.mrb[0].mxu0 %v549
      %v594 = vpop.f32.mrb[0].mxu0
      %v595 = vadd.f32 0.0, %v594
      %v596 = vpop.f32.mrb[0].mxu0
      %v597 = vpop.f32.mrb[0].mxu0
      %v598 = vadd.f32 0.0, %v597
      %v599 = vpop.f32.mrb[0].mxu0
      %600 = vmatprep.mubr.bf16.mxu0 0
      %601 = vmatmul.mubr.bf16.gmra.mrb[0].mxu0 %v552
      %v602 = vpop.f32.mrb[0].mxu0
      %v603 = vadd.f32 0.0, %v602
      %v604 = vpop.f32.mrb[0].mxu0
      %v605 = vpop.f32.mrb[0].mxu0
      %v606 = vadd.f32 0.0, %v605
      %v607 = vpop.f32.mrb[0].mxu0
      %608 = vmatprep.mubr.bf16.mxu0 0
      %609 = vmatmul.mubr.bf16.gmra.mrb[0].mxu0 %v555
      %v610 = vpop.f32.mrb[0].mxu0
      %v611 = vadd.f32 0.0, %v610
      %v612 = vpop.f32.mrb[0].mxu0
      %v613 = vpop.f32.mrb[0].mxu0
      %v614 = vadd.f32 0.0, %v613
      %v615 = vpop.f32.mrb[0].mxu0
      %616 = vmatprep.mubr.bf16.mxu0 0
      %617 = vmatmul.mubr.bf16.gmra.mrb[0].mxu0 %v558
      %v618 = vpop.f32.mrb[0].mxu0
      %v619 = vadd.f32 0.0, %v618
      %v620 = vpop.f32.mrb[0].mxu0
      %v621 = vpop.f32.mrb[0].mxu0
      %v622 = vadd.f32 0.0, %v621
      %v623 = vpop.f32.mrb[0].mxu0
      %624 = vdwg.mxu0
      %v625 = vld [vmem:[#allocation2] sm:$0xff]
      %v626 = vld [vmem:[#allocation2 + $0x8] sm:$0xff]
      %v627 = vld [vmem:[#allocation2 + $0x10] sm:$0xff]
      %v628 = vld [vmem:[#allocation2 + $0x18] sm:$0xff]
      %v629 = vld [vmem:[#allocation2 + $0x20] sm:$0xff]
      %v630 = vld [vmem:[#allocation2 + $0x28] sm:$0xff]
      %v631 = vld [vmem:[#allocation2 + $0x30] sm:$0xff]
      %v632 = vld [vmem:[#allocation2 + $0x38] sm:$0xff]
      %v633 = vmul.f32 %v486, %v625
      %v634 = vmul.f32 %v489, %v626
      %v635 = vmul.f32 %v494, %v627
      %v636 = vmul.f32 %v497, %v628
      %v637 = vmul.f32 %v502, %v629
      %v638 = vmul.f32 %v505, %v630
      %v639 = vmul.f32 %v510, %v631
      %v640 = vmul.f32 %v513, %v632
      %v641 = vld [vmem:[#allocation3] sm:$0xff]
      %v642 = vld [vmem:[#allocation3 + $0x8] sm:$0xff]
      %v643 = vld [vmem:[#allocation3 + $0x10] sm:$0xff]
      %v644 = vld [vmem:[#allocation3 + $0x18] sm:$0xff]
      %v645 = vld [vmem:[#allocation3 + $0x20] sm:$0xff]
      %v646 = vld [vmem:[#allocation3 + $0x28] sm:$0xff]
      %v647 = vld [vmem:[#allocation3 + $0x30] sm:$0xff]
      %v648 = vld [vmem:[#allocation3 + $0x38] sm:$0xff]
      %v649 = vmul.f32 %v595, %v641
      %v650 = vmul.f32 %v598, %v642
      %v651 = vmul.f32 %v603, %v643
      %v652 = vmul.f32 %v606, %v644
      %v653 = vmul.f32 %v611, %v645
      %v654 = vmul.f32 %v614, %v646
      %v655 = vmul.f32 %v619, %v647
      %v656 = vmul.f32 %v622, %v648
      %v657 = vld [vmem:[%s326] sm:$0xf]
      %v658 = vld [vmem:[%s326 + $0x4] sm:$0xf]
      %v659 = vld [vmem:[%s326 + $0x8] sm:$0xf]
      %v660 = vld [vmem:[%s326 + $0xc] sm:$0xf]
      %v661 = vld [vmem:[%s326 + $0x10] sm:$0xf]
      %v662 = vld [vmem:[%s326 + $0x14] sm:$0xf]
      %v663 = vld [vmem:[%s326 + $0x18] sm:$0xf]
      %v664 = vld [vmem:[%s326 + $0x1c] sm:$0xf]
      %v665 = vld [vmem:[%s326 + $0x20] sm:$0xf]
      %v666 = vld [vmem:[%s326 + $0x24] sm:$0xf]
      %v667 = vld [vmem:[%s326 + $0x28] sm:$0xf]
      %v668 = vld [vmem:[%s326 + $0x2c] sm:$0xf]
      %v669 = vld [vmem:[%s326 + $0x30] sm:$0xf]
      %v670 = vld [vmem:[%s326 + $0x34] sm:$0xf]
      %v671 = vld [vmem:[%s326 + $0x38] sm:$0xf]
      %v672 = vld [vmem:[%s326 + $0x3c] sm:$0xf]
      %v673 = vld [vmem:[%s331] sm:$0xf]
      %v674 = vld [vmem:[%s331 + $0x4] sm:$0xf]
      %v675 = vld [vmem:[%s331 + $0x8] sm:$0xf]
      %v676 = vld [vmem:[%s331 + $0xc] sm:$0xf]
      %v677 = vld [vmem:[%s331 + $0x10] sm:$0xf]
      %v678 = vld [vmem:[%s331 + $0x14] sm:$0xf]
      %v679 = vld [vmem:[%s331 + $0x18] sm:$0xf]
      %v680 = vld [vmem:[%s331 + $0x1c] sm:$0xf]
      %v681 = vld [vmem:[%s331 + $0x20] sm:$0xf]
      %v682 = vld [vmem:[%s331 + $0x24] sm:$0xf]
      %v683 = vld [vmem:[%s331 + $0x28] sm:$0xf]
      %v684 = vld [vmem:[%s331 + $0x2c] sm:$0xf]
      %v685 = vld [vmem:[%s331 + $0x30] sm:$0xf]
      %v686 = vld [vmem:[%s331 + $0x34] sm:$0xf]
      %v687 = vld [vmem:[%s331 + $0x38] sm:$0xf]
      %v688 = vld [vmem:[%s331 + $0x3c] sm:$0xf]
      %v689 = vld [vmem:[%s7] sm:$0xff]
      %v690 = vld [vmem:[%s7 + $0x8] sm:$0xff]
      %v691 = vld [vmem:[%s7 + $0x10] sm:$0xff]
      %v692 = vld [vmem:[%s7 + $0x18] sm:$0xff]
      %v693 = vld [vmem:[%s7 + $0x20] sm:$0xff]
      %v694 = vld [vmem:[%s7 + $0x28] sm:$0xff]
      %v695 = vld [vmem:[%s7 + $0x30] sm:$0xff]
      %v696 = vld [vmem:[%s7 + $0x38] sm:$0xff]
      %v697 = vpack.c.bf16 %v489, %v486
      %v698 = vpack.c.bf16 %v497, %v494
      %v699 = vpack.c.bf16 %v505, %v502
      %v700 = vpack.c.bf16 %v513, %v510
      %v701 = vpack.c.bf16 %v634, %v633
      %v702 = vpack.c.bf16 %v636, %v635
      %v703 = vpack.c.bf16 %v638, %v637
      %v704 = vpack.c.bf16 %v640, %v639
      %v721 = vunpack.c.l.b16 %v673
      %v722 = vunpack.c.l.b16 %v674
      %v723 = vunpack.c.l.b16 %v675
      %v724 = vunpack.c.l.b16 %v676
      %v725 = vunpack.c.l.b16 %v677
      %v726 = vunpack.c.l.b16 %v678
      %v727 = vunpack.c.l.b16 %v679
      %v728 = vunpack.c.l.b16 %v680
      %v729 = vunpack.c.l.b16 %v681
      %v730 = vunpack.c.l.b16 %v682
      %v731 = vunpack.c.l.b16 %v683
      %v732 = vunpack.c.l.b16 %v684
      %v733 = vunpack.c.l.b16 %v685
      %v734 = vunpack.c.l.b16 %v686
      %v735 = vunpack.c.l.b16 %v687
      %v736 = vunpack.c.l.b16 %v688
      %v737 = vpack.c.b16 %v722, %v721
      %v738 = vpack.c.b16 %v724, %v723
      %v739 = vpack.c.b16 %v726, %v725
      %v740 = vpack.c.b16 %v728, %v727
      %v741 = vpack.c.b16 %v730, %v729
      %v742 = vpack.c.b16 %v732, %v731
      %v743 = vpack.c.b16 %v734, %v733
      %v744 = vpack.c.b16 %v736, %v735
      %753 = vmatprep.subr.bf16.mxu0 0
      %754 = vmatpush1.bf16.msra.mxu0 %v737
      %755 = vmatprep.subr.bf16.mxu0 0
      %756 = vmatpush1.bf16.msra.mxu0 %v738
      %757 = vmatprep.subr.bf16.mxu0 0
      %758 = vmatpush1.bf16.msra.mxu0 %v739
      %759 = vmatprep.subr.bf16.mxu0 0
      %760 = vmatpush1.bf16.msra.mxu0 %v740
      %761 = vmatprep.subr.bf16.mxu0 0
      %762 = vmatpush1.bf16.msra.mxu0 %v741
      %763 = vmatprep.subr.bf16.mxu0 0
      %764 = vmatpush1.bf16.msra.mxu0 %v742
      %765 = vmatprep.subr.bf16.mxu0 0
      %766 = vmatpush1.bf16.msra.mxu0 %v743
      %767 = vmatprep.subr.bf16.mxu0 0
      %768 = vmatpush1.bf16.msra.mxu0 %v744
      %769 = vmatprep.subr.bf16.mxu0 0
      %770 = vmatpush1.bf16.msra.mxu0 0
      %771 = vmatprep.subr.bf16.mxu0 0
      %772 = vmatpush1.bf16.msra.mxu0 0
      %773 = vmatprep.subr.bf16.mxu0 0
      %774 = vmatpush1.bf16.msra.mxu0 0
      %775 = vmatprep.subr.bf16.mxu0 0
      %776 = vmatpush1.bf16.msra.mxu0 0
      %777 = vmatprep.subr.bf16.mxu0 0
      %778 = vmatpush1.bf16.msra.mxu0 0
      %779 = vmatprep.subr.bf16.mxu0 0
      %780 = vmatpush1.bf16.msra.mxu0 0
      %781 = vmatprep.subr.bf16.mxu0 0
      %782 = vmatpush1.bf16.msra.mxu0 0
      %783 = vmatprep.subr.bf16.mxu0 0
      %784 = vmatpush1.bf16.msra.mxu0 0
      %785 = vmatprep.mubr.bf16.mxu0 0
      %786 = vmatmul.mubr.bf16.gmra.mrb[0].mxu0 %v701
      %v787 = vpop.f32.mrb[0].mxu0
      %v788 = vadd.f32 0.0, %v787
      %v789 = vpop.f32.mrb[0].mxu0
      %v790 = vpop.f32.mrb[0].mxu0
      %v791 = vadd.f32 0.0, %v790
      %v792 = vpop.f32.mrb[0].mxu0
      %793 = vmatprep.mubr.bf16.mxu0 0
      %794 = vmatmul.mubr.bf16.gmra.mrb[0].mxu0 %v702
      %v795 = vpop.f32.mrb[0].mxu0
      %v796 = vadd.f32 0.0, %v795
      %v797 = vpop.f32.mrb[0].mxu0
      %v798 = vpop.f32.mrb[0].mxu0
      %v799 = vadd.f32 0.0, %v798
      %v800 = vpop.f32.mrb[0].mxu0
      %801 = vmatprep.mubr.bf16.mxu0 0
      %802 = vmatmul.mubr.bf16.gmra.mrb[0].mxu0 %v703
      %v803 = vpop.f32.mrb[0].mxu0
      %v804 = vadd.f32 0.0, %v803
      %v805 = vpop.f32.mrb[0].mxu0
      %v806 = vpop.f32.mrb[0].mxu0
      %v807 = vadd.f32 0.0, %v806
      %v808 = vpop.f32.mrb[0].mxu0
      %809 = vmatprep.mubr.bf16.mxu0 0
      %810 = vmatmul.mubr.bf16.gmra.mrb[0].mxu0 %v704
      %v811 = vpop.f32.mrb[0].mxu0
      %v812 = vadd.f32 0.0, %v811
      %v813 = vpop.f32.mrb[0].mxu0
      %v814 = vpop.f32.mrb[0].mxu0
      %v815 = vadd.f32 0.0, %v814
      %v816 = vpop.f32.mrb[0].mxu0
      %817 = vdwg.mxu0
      %v834 = vunpack.c.l.b16 %v657
      %v835 = vunpack.c.l.b16 %v658
      %v836 = vunpack.c.l.b16 %v659
      %v837 = vunpack.c.l.b16 %v660
      %v838 = vunpack.c.l.b16 %v661
      %v839 = vunpack.c.l.b16 %v662
      %v840 = vunpack.c.l.b16 %v663
      %v841 = vunpack.c.l.b16 %v664
      %v842 = vunpack.c.l.b16 %v665
      %v843 = vunpack.c.l.b16 %v666
      %v844 = vunpack.c.l.b16 %v667
      %v845 = vunpack.c.l.b16 %v668
      %v846 = vunpack.c.l.b16 %v669
      %v847 = vunpack.c.l.b16 %v670
      %v848 = vunpack.c.l.b16 %v671
      %v849 = vunpack.c.l.b16 %v672
      %v850 = vpack.c.b16 %v835, %v834
      %v851 = vpack.c.b16 %v837, %v836
      %v852 = vpack.c.b16 %v839, %v838
      %v853 = vpack.c.b16 %v841, %v840
      %v854 = vpack.c.b16 %v843, %v842
      %v855 = vpack.c.b16 %v845, %v844
      %v856 = vpack.c.b16 %v847, %v846
      %v857 = vpack.c.b16 %v849, %v848
      %866 = vmatprep.subr.bf16.mxu0 0
      %867 = vmatpush1.bf16.msra.mxu0 %v850
      %868 = vmatprep.subr.bf16.mxu0 0
      %869 = vmatpush1.bf16.msra.mxu0 %v851
      %870 = vmatprep.subr.bf16.mxu0 0
      %871 = vmatpush1.bf16.msra.mxu0 %v852
      %872 = vmatprep.subr.bf16.mxu0 0
      %873 = vmatpush1.bf16.msra.mxu0 %v853
      %874 = vmatprep.subr.bf16.mxu0 0
      %875 = vmatpush1.bf16.msra.mxu0 %v854
      %876 = vmatprep.subr.bf16.mxu0 0
      %877 = vmatpush1.bf16.msra.mxu0 %v855
      %878 = vmatprep.subr.bf16.mxu0 0
      %879 = vmatpush1.bf16.msra.mxu0 %v856
      %880 = vmatprep.subr.bf16.mxu0 0
      %881 = vmatpush1.bf16.msra.mxu0 %v857
      %882 = vmatprep.subr.bf16.mxu0 0
      %883 = vmatpush1.bf16.msra.mxu0 0
      %884 = vmatprep.subr.bf16.mxu0 0
      %885 = vmatpush1.bf16.msra.mxu0 0
      %886 = vmatprep.subr.bf16.mxu0 0
      %887 = vmatpush1.bf16.msra.mxu0 0
      %888 = vmatprep.subr.bf16.mxu0 0
      %889 = vmatpush1.bf16.msra.mxu0 0
      %890 = vmatprep.subr.bf16.mxu0 0
      %891 = vmatpush1.bf16.msra.mxu0 0
      %892 = vmatprep.subr.bf16.mxu0 0
      %893 = vmatpush1.bf16.msra.mxu0 0
      %894 = vmatprep.subr.bf16.mxu0 0
      %895 = vmatpush1.bf16.msra.mxu0 0
      %896 = vmatprep.subr.bf16.mxu0 0
      %897 = vmatpush1.bf16.msra.mxu0 0
      %898 = vmatprep.mubr.bf16.mxu0 0
      %899 = vmatmul.mubr.bf16.gmra.mrb[0].mxu0 %v697
      %v900 = vpop.f32.mrb[0].mxu0
      %v901 = vadd.f32 %v788, %v900
      %v902 = vpop.f32.mrb[0].mxu0
      %v903 = vpop.f32.mrb[0].mxu0
      %v904 = vadd.f32 %v791, %v903
      %v905 = vpop.f32.mrb[0].mxu0
      %906 = vmatprep.mubr.bf16.mxu0 0
      %907 = vmatmul.mubr.bf16.gmra.mrb[0].mxu0 %v698
      %v908 = vpop.f32.mrb[0].mxu0
      %v909 = vadd.f32 %v796, %v908
      %v910 = vpop.f32.mrb[0].mxu0
      %v911 = vpop.f32.mrb[0].mxu0
      %v912 = vadd.f32 %v799, %v911
      %v913 = vpop.f32.mrb[0].mxu0
      %914 = vmatprep.mubr.bf16.mxu0 0
      %915 = vmatmul.mubr.bf16.gmra.mrb[0].mxu0 %v699
      %v916 = vpop.f32.mrb[0].mxu0
      %v917 = vadd.f32 %v804, %v916
      %v918 = vpop.f32.mrb[0].mxu0
      %v919 = vpop.f32.mrb[0].mxu0
      %v920 = vadd.f32 %v807, %v919
      %v921 = vpop.f32.mrb[0].mxu0
      %922 = vmatprep.mubr.bf16.mxu0 0
      %923 = vmatmul.mubr.bf16.gmra.mrb[0].mxu0 %v700
      %v924 = vpop.f32.mrb[0].mxu0
      %v925 = vadd.f32 %v812, %v924
      %v926 = vpop.f32.mrb[0].mxu0
      %v927 = vpop.f32.mrb[0].mxu0
      %v928 = vadd.f32 %v815, %v927
      %v929 = vpop.f32.mrb[0].mxu0
      %930 = vdwg.mxu0
      %v931 = vadd.f32 %v689, %v901
      %v932 = vadd.f32 %v690, %v904
      %v933 = vadd.f32 %v691, %v909
      %v934 = vadd.f32 %v692, %v912
      %v935 = vadd.f32 %v693, %v917
      %v936 = vadd.f32 %v694, %v920
      %v937 = vadd.f32 %v695, %v925
      %v938 = vadd.f32 %v696, %v928
      %939 = vst [vmem:[%s7] sm:$0xff] %v931
      %940 = vst [vmem:[%s7 + $0x8] sm:$0xff] %v932
      %941 = vst [vmem:[%s7 + $0x10] sm:$0xff] %v933
      %942 = vst [vmem:[%s7 + $0x18] sm:$0xff] %v934
      %943 = vst [vmem:[%s7 + $0x20] sm:$0xff] %v935
      %944 = vst [vmem:[%s7 + $0x28] sm:$0xff] %v936
      %945 = vst [vmem:[%s7 + $0x30] sm:$0xff] %v937
      %946 = vst [vmem:[%s7 + $0x38] sm:$0xff] %v938
      %v947 = vld [vmem:[%s8] sm:$0xff]
      %v948 = vld [vmem:[%s8 + $0x8] sm:$0xff]
      %v949 = vld [vmem:[%s8 + $0x10] sm:$0xff]
      %v950 = vld [vmem:[%s8 + $0x18] sm:$0xff]
      %v951 = vld [vmem:[%s8 + $0x20] sm:$0xff]
      %v952 = vld [vmem:[%s8 + $0x28] sm:$0xff]
      %v953 = vld [vmem:[%s8 + $0x30] sm:$0xff]
      %v954 = vld [vmem:[%s8 + $0x38] sm:$0xff]
      %v955 = vpack.c.bf16 %v598, %v595
      %v956 = vpack.c.bf16 %v606, %v603
      %v957 = vpack.c.bf16 %v614, %v611
      %v958 = vpack.c.bf16 %v622, %v619
      %v959 = vpack.c.bf16 %v650, %v649
      %v960 = vpack.c.bf16 %v652, %v651
      %v961 = vpack.c.bf16 %v654, %v653
      %v962 = vpack.c.bf16 %v656, %v655
      %963 = vmatprep.subr.bf16.mxu0 0
      %964 = vmatpush1.bf16.msra.mxu0 %v737
      %965 = vmatprep.subr.bf16.mxu0 0
      %966 = vmatpush1.bf16.msra.mxu0 %v738
      %967 = vmatprep.subr.bf16.mxu0 0
      %968 = vmatpush1.bf16.msra.mxu0 %v739
      %969 = vmatprep.subr.bf16.mxu0 0
      %970 = vmatpush1.bf16.msra.mxu0 %v740
      %971 = vmatprep.subr.bf16.mxu0 0
      %972 = vmatpush1.bf16.msra.mxu0 %v741
      %973 = vmatprep.subr.bf16.mxu0 0
      %974 = vmatpush1.bf16.msra.mxu0 %v742
      %975 = vmatprep.subr.bf16.mxu0 0
      %976 = vmatpush1.bf16.msra.mxu0 %v743
      %977 = vmatprep.subr.bf16.mxu0 0
      %978 = vmatpush1.bf16.msra.mxu0 %v744
      %979 = vmatprep.subr.bf16.mxu0 0
      %980 = vmatpush1.bf16.msra.mxu0 0
      %981 = vmatprep.subr.bf16.mxu0 0
      %982 = vmatpush1.bf16.msra.mxu0 0
      %983 = vmatprep.subr.bf16.mxu0 0
      %984 = vmatpush1.bf16.msra.mxu0 0
      %985 = vmatprep.subr.bf16.mxu0 0
      %986 = vmatpush1.bf16.msra.mxu0 0
      %987 = vmatprep.subr.bf16.mxu0 0
      %988 = vmatpush1.bf16.msra.mxu0 0
      %989 = vmatprep.subr.bf16.mxu0 0
      %990 = vmatpush1.bf16.msra.mxu0 0
      %991 = vmatprep.subr.bf16.mxu0 0
      %992 = vmatpush1.bf16.msra.mxu0 0
      %993 = vmatprep.subr.bf16.mxu0 0
      %994 = vmatpush1.bf16.msra.mxu0 0
      %995 = vmatprep.mubr.bf16.mxu0 0
      %996 = vmatmul.mubr.bf16.gmra.mrb[0].mxu0 %v959
      %v997 = vpop.f32.mrb[0].mxu0
      %v998 = vadd.f32 0.0, %v997
      %v999 = vpop.f32.mrb[0].mxu0
      %v1000 = vpop.f32.mrb[0].mxu0
      %v1001 = vadd.f32 0.0, %v1000
      %v1002 = vpop.f32.mrb[0].mxu0
      %1003 = vmatprep.mubr.bf16.mxu0 0
      %1004 = vmatmul.mubr.bf16.gmra.mrb[0].mxu0 %v960
      %v1005 = vpop.f32.mrb[0].mxu0
      %v1006 = vadd.f32 0.0, %v1005
      %v1007 = vpop.f32.mrb[0].mxu0
      %v1008 = vpop.f32.mrb[0].mxu0
      %v1009 = vadd.f32 0.0, %v1008
      %v1010 = vpop.f32.mrb[0].mxu0
      %1011 = vmatprep.mubr.bf16.mxu0 0
      %1012 = vmatmul.mubr.bf16.gmra.mrb[0].mxu0 %v961
      %v1013 = vpop.f32.mrb[0].mxu0
      %v1014 = vadd.f32 0.0, %v1013
      %v1015 = vpop.f32.mrb[0].mxu0
      %v1016 = vpop.f32.mrb[0].mxu0
      %v1017 = vadd.f32 0.0, %v1016
      %v1018 = vpop.f32.mrb[0].mxu0
      %1019 = vmatprep.mubr.bf16.mxu0 0
      %1020 = vmatmul.mubr.bf16.gmra.mrb[0].mxu0 %v962
      %v1021 = vpop.f32.mrb[0].mxu0
      %v1022 = vadd.f32 0.0, %v1021
      %v1023 = vpop.f32.mrb[0].mxu0
      %v1024 = vpop.f32.mrb[0].mxu0
      %v1025 = vadd.f32 0.0, %v1024
      %v1026 = vpop.f32.mrb[0].mxu0
      %1027 = vdwg.mxu0
      %1028 = vmatprep.subr.bf16.mxu0 0
      %1029 = vmatpush1.bf16.msra.mxu0 %v850
      %1030 = vmatprep.subr.bf16.mxu0 0
      %1031 = vmatpush1.bf16.msra.mxu0 %v851
      %1032 = vmatprep.subr.bf16.mxu0 0
      %1033 = vmatpush1.bf16.msra.mxu0 %v852
      %1034 = vmatprep.subr.bf16.mxu0 0
      %1035 = vmatpush1.bf16.msra.mxu0 %v853
      %1036 = vmatprep.subr.bf16.mxu0 0
      %1037 = vmatpush1.bf16.msra.mxu0 %v854
      %1038 = vmatprep.subr.bf16.mxu0 0
      %1039 = vmatpush1.bf16.msra.mxu0 %v855
      %1040 = vmatprep.subr.bf16.mxu0 0
      %1041 = vmatpush1.bf16.msra.mxu0 %v856
      %1042 = vmatprep.subr.bf16.mxu0 0
      %1043 = vmatpush1.bf16.msra.mxu0 %v857
      %1044 = vmatprep.subr.bf16.mxu0 0
      %1045 = vmatpush1.bf16.msra.mxu0 0
      %1046 = vmatprep.subr.bf16.mxu0 0
      %1047 = vmatpush1.bf16.msra.mxu0 0
      %1048 = vmatprep.subr.bf16.mxu0 0
      %1049 = vmatpush1.bf16.msra.mxu0 0
      %1050 = vmatprep.subr.bf16.mxu0 0
      %1051 = vmatpush1.bf16.msra.mxu0 0
      %1052 = vmatprep.subr.bf16.mxu0 0
      %1053 = vmatpush1.bf16.msra.mxu0 0
      %1054 = vmatprep.subr.bf16.mxu0 0
      %1055 = vmatpush1.bf16.msra.mxu0 0
      %1056 = vmatprep.subr.bf16.mxu0 0
      %1057 = vmatpush1.bf16.msra.mxu0 0
      %1058 = vmatprep.subr.bf16.mxu0 0
      %1059 = vmatpush1.bf16.msra.mxu0 0
      %1060 = vmatprep.mubr.bf16.mxu0 0
      %1061 = vmatmul.mubr.bf16.gmra.mrb[0].mxu0 %v955
      %v1062 = vpop.f32.mrb[0].mxu0
      %v1063 = vadd.f32 %v998, %v1062
      %v1064 = vpop.f32.mrb[0].mxu0
      %v1065 = vpop.f32.mrb[0].mxu0
      %v1066 = vadd.f32 %v1001, %v1065
      %v1067 = vpop.f32.mrb[0].mxu0
      %1068 = vmatprep.mubr.bf16.mxu0 0
      %1069 = vmatmul.mubr.bf16.gmra.mrb[0].mxu0 %v956
      %v1070 = vpop.f32.mrb[0].mxu0
      %v1071 = vadd.f32 %v1006, %v1070
      %v1072 = vpop.f32.mrb[0].mxu0
      %v1073 = vpop.f32.mrb[0].mxu0
      %v1074 = vadd.f32 %v1009, %v1073
      %v1075 = vpop.f32.mrb[0].mxu0
      %1076 = vmatprep.mubr.bf16.mxu0 0
      %1077 = vmatmul.mubr.bf16.gmra.mrb[0].mxu0 %v957
      %v1078 = vpop.f32.mrb[0].mxu0
      %v1079 = vadd.f32 %v1014, %v1078
      %v1080 = vpop.f32.mrb[0].mxu0
      %v1081 = vpop.f32.mrb[0].mxu0
      %v1082 = vadd.f32 %v1017, %v1081
      %v1083 = vpop.f32.mrb[0].mxu0
      %1084 = vmatprep.mubr.bf16.mxu0 0
      %1085 = vmatmul.mubr.bf16.gmra.mrb[0].mxu0 %v958
      %v1086 = vpop.f32.mrb[0].mxu0
      %v1087 = vadd.f32 %v1022, %v1086
      %v1088 = vpop.f32.mrb[0].mxu0
      %v1089 = vpop.f32.mrb[0].mxu0
      %v1090 = vadd.f32 %v1025, %v1089
      %v1091 = vpop.f32.mrb[0].mxu0
      %1092 = vdwg.mxu0
      %v1093 = vadd.f32 %v947, %v1063
      %v1094 = vadd.f32 %v948, %v1066
      %v1095 = vadd.f32 %v949, %v1071
      %v1096 = vadd.f32 %v950, %v1074
      %v1097 = vadd.f32 %v951, %v1079
      %v1098 = vadd.f32 %v952, %v1082
      %v1099 = vadd.f32 %v953, %v1087
      %v1100 = vadd.f32 %v954, %v1090
      %1101 = vst [vmem:[%s8] sm:$0xff] %v1093
      %1102 = vst [vmem:[%s8 + $0x8] sm:$0xff] %v1094
      %1103 = vst [vmem:[%s8 + $0x10] sm:$0xff] %v1095
      %1104 = vst [vmem:[%s8 + $0x18] sm:$0xff] %v1096
      %1105 = vst [vmem:[%s8 + $0x20] sm:$0xff] %v1097
      %1106 = vst [vmem:[%s8 + $0x28] sm:$0xff] %v1098
      %1107 = vst [vmem:[%s8 + $0x30] sm:$0xff] %v1099
      %1108 = vst [vmem:[%s8 + $0x38] sm:$0xff] %v1100
      %v1109 = vadd.f32 %v486, %v633
      %v1110 = vadd.f32 %v489, %v634
      %v1111 = vadd.f32 %v494, %v635
      %v1112 = vadd.f32 %v497, %v636
      %v1113 = vadd.f32 %v502, %v637
      %v1114 = vadd.f32 %v505, %v638
      %v1115 = vadd.f32 %v510, %v639
      %v1116 = vadd.f32 %v513, %v640
      %v1117 = vadd.f32 %v595, %v649
      %v1118 = vadd.f32 %v598, %v650
      %v1119 = vadd.f32 %v603, %v651
      %v1120 = vadd.f32 %v606, %v652
      %v1121 = vadd.f32 %v611, %v653
      %v1122 = vadd.f32 %v614, %v654
      %v1123 = vadd.f32 %v619, %v655
      %v1124 = vadd.f32 %v622, %v656
      %1125 = vst [vmem:[#allocation2] sm:$0xff] %v1109
      %1126 = vst [vmem:[#allocation2 + $0x8] sm:$0xff] %v1110
      %1127 = vst [vmem:[#allocation2 + $0x10] sm:$0xff] %v1111
      %1128 = vst [vmem:[#allocation2 + $0x18] sm:$0xff] %v1112
      %1129 = vst [vmem:[#allocation2 + $0x20] sm:$0xff] %v1113
      %1130 = vst [vmem:[#allocation2 + $0x28] sm:$0xff] %v1114
      %1131 = vst [vmem:[#allocation2 + $0x30] sm:$0xff] %v1115
      %1132 = vst [vmem:[#allocation2 + $0x38] sm:$0xff] %v1116
      %1133 = vst [vmem:[#allocation3] sm:$0xff] %v1117
      %1134 = vst [vmem:[#allocation3 + $0x8] sm:$0xff] %v1118
      %1135 = vst [vmem:[#allocation3 + $0x10] sm:$0xff] %v1119
      %1136 = vst [vmem:[#allocation3 + $0x18] sm:$0xff] %v1120
      %1137 = vst [vmem:[#allocation3 + $0x20] sm:$0xff] %v1121
      %1138 = vst [vmem:[#allocation3 + $0x28] sm:$0xff] %v1122
      %1139 = vst [vmem:[#allocation3 + $0x30] sm:$0xff] %v1123
      %1140 = vst [vmem:[#allocation3 + $0x38] sm:$0xff] %v1124
      %v1141 = vpack.c.bf16 %v1110, %v1109
      %v1142 = vpack.c.bf16 %v1112, %v1111
      %v1143 = vpack.c.bf16 %v1114, %v1113
      %v1144 = vpack.c.bf16 %v1116, %v1115
      %1145 = vst [vmem:[#allocation4] sm:$0xff] %v1141
      %1146 = vst [vmem:[#allocation4 + $0x8] sm:$0xff] %v1142
      %1147 = vst [vmem:[#allocation4 + $0x10] sm:$0xff] %v1143
      %1148 = vst [vmem:[#allocation4 + $0x18] sm:$0xff] %v1144
      %v1149 = vpack.c.bf16 %v1118, %v1117
      %v1150 = vpack.c.bf16 %v1120, %v1119
      %v1151 = vpack.c.bf16 %v1122, %v1121
      %v1152 = vpack.c.bf16 %v1124, %v1123
      %1153 = vst [vmem:[#allocation5] sm:$0xff] %v1149
      %1154 = vst [vmem:[#allocation5 + $0x8] sm:$0xff] %v1150
      %1155 = vst [vmem:[#allocation5 + $0x10] sm:$0xff] %v1151
      %1156 = vst [vmem:[#allocation5 + $0x18] sm:$0xff] %v1152
      %p1157 = scmp.eq.s32.totalorder %s25, 1
      %p1158 = pnand %p336, %p1157
      %p1159 = pneg %p1158
      // Predicated region
      $region53: #{layers_forward.1} parent=47 // pred_check
        _
      $region54: #{layers_forward.1} parent=47 // pred_check_branch
        %1161 = sbr.rel (%p1158) target = $region56
      $region55: #{layers_forward.1} parent=47 // pred_region
        %v1162 = vld [vmem:[%s334] sm:$0x1]
        %v1163 = vld [vmem:[%s7] sm:$0xff]
        %v1164 = vld [vmem:[%s7 + $0x8] sm:$0xff]
        %v1165 = vld [vmem:[%s7 + $0x10] sm:$0xff]
        %v1166 = vld [vmem:[%s7 + $0x18] sm:$0xff]
        %v1167 = vld [vmem:[%s7 + $0x20] sm:$0xff]
        %v1168 = vld [vmem:[%s7 + $0x28] sm:$0xff]
        %v1169 = vld [vmem:[%s7 + $0x30] sm:$0xff]
        %v1170 = vld [vmem:[%s7 + $0x38] sm:$0xff]
        %v1172 = vlaneseq
        %v1173 = vshrl.u32 %v1172, 7
        %v1174 = vsub.s32 0, %v1173
        %v1175 = vrot.slane %v1162, %v1174
        %v1177 = vadd.f32 %v1163, %v1175
        %v1178 = vadd.f32 %v1164, %v1175
        %v1179 = vadd.f32 %v1165, %v1175
        %v1180 = vadd.f32 %v1166, %v1175
        %v1181 = vadd.f32 %v1167, %v1175
        %v1182 = vadd.f32 %v1168, %v1175
        %v1183 = vadd.f32 %v1169, %v1175
        %v1184 = vadd.f32 %v1170, %v1175
        %v1185 = vmax.f32 %v1177, 0.0
        %v1186 = vmax.f32 %v1178, 0.0
        %v1187 = vmax.f32 %v1179, 0.0
        %v1188 = vmax.f32 %v1180, 0.0
        %v1189 = vmax.f32 %v1181, 0.0
        %v1190 = vmax.f32 %v1182, 0.0
        %v1191 = vmax.f32 %v1183, 0.0
        %v1192 = vmax.f32 %v1184, 0.0
        %v1193 = vld [vmem:[%s8] sm:$0xff]
        %v1194 = vld [vmem:[%s8 + $0x8] sm:$0xff]
        %v1195 = vld [vmem:[%s8 + $0x10] sm:$0xff]
        %v1196 = vld [vmem:[%s8 + $0x18] sm:$0xff]
        %v1197 = vld [vmem:[%s8 + $0x20] sm:$0xff]
        %v1198 = vld [vmem:[%s8 + $0x28] sm:$0xff]
        %v1199 = vld [vmem:[%s8 + $0x30] sm:$0xff]
        %v1200 = vld [vmem:[%s8 + $0x38] sm:$0xff]
        %v1201 = vadd.f32 %v1193, %v1175
        %v1202 = vadd.f32 %v1194, %v1175
        %v1203 = vadd.f32 %v1195, %v1175
        %v1204 = vadd.f32 %v1196, %v1175
        %v1205 = vadd.f32 %v1197, %v1175
        %v1206 = vadd.f32 %v1198, %v1175
        %v1207 = vadd.f32 %v1199, %v1175
        %v1208 = vadd.f32 %v1200, %v1175
        %v1209 = vmax.f32 %v1201, 0.0
        %v1210 = vmax.f32 %v1202, 0.0
        %v1211 = vmax.f32 %v1203, 0.0
        %v1212 = vmax.f32 %v1204, 0.0
        %v1213 = vmax.f32 %v1205, 0.0
        %v1214 = vmax.f32 %v1206, 0.0
        %v1215 = vmax.f32 %v1207, 0.0
        %v1216 = vmax.f32 %v1208, 0.0
        %1217 = vst [vmem:[#allocation2] sm:$0xff] %v1185
        %1218 = vst [vmem:[#allocation2 + $0x8] sm:$0xff] %v1186
        %1219 = vst [vmem:[#allocation2 + $0x10] sm:$0xff] %v1187
        %1220 = vst [vmem:[#allocation2 + $0x18] sm:$0xff] %v1188
        %1221 = vst [vmem:[#allocation2 + $0x20] sm:$0xff] %v1189
        %1222 = vst [vmem:[#allocation2 + $0x28] sm:$0xff] %v1190
        %1223 = vst [vmem:[#allocation2 + $0x30] sm:$0xff] %v1191
        %1224 = vst [vmem:[#allocation2 + $0x38] sm:$0xff] %v1192
        %v1225 = vpack.c.bf16 %v1186, %v1185
        %v1226 = vpack.c.bf16 %v1188, %v1187
        %v1227 = vpack.c.bf16 %v1190, %v1189
        %v1228 = vpack.c.bf16 %v1192, %v1191
        %1229 = vst [vmem:[#allocation4] sm:$0xff] %v1225
        %1230 = vst [vmem:[#allocation4 + $0x8] sm:$0xff] %v1226
        %1231 = vst [vmem:[#allocation4 + $0x10] sm:$0xff] %v1227
        %1232 = vst [vmem:[#allocation4 + $0x18] sm:$0xff] %v1228
        %1233 = vst [vmem:[#allocation3] sm:$0xff] %v1209
        %1234 = vst [vmem:[#allocation3 + $0x8] sm:$0xff] %v1210
        %1235 = vst [vmem:[#allocation3 + $0x10] sm:$0xff] %v1211
        %1236 = vst [vmem:[#allocation3 + $0x18] sm:$0xff] %v1212
        %1237 = vst [vmem:[#allocation3 + $0x20] sm:$0xff] %v1213
        %1238 = vst [vmem:[#allocation3 + $0x28] sm:$0xff] %v1214
        %1239 = vst [vmem:[#allocation3 + $0x30] sm:$0xff] %v1215
        %1240 = vst [vmem:[#allocation3 + $0x38] sm:$0xff] %v1216
        %v1241 = vpack.c.bf16 %v1210, %v1209
        %v1242 = vpack.c.bf16 %v1212, %v1211
        %v1243 = vpack.c.bf16 %v1214, %v1213
        %v1244 = vpack.c.bf16 %v1216, %v1215
        %1245 = vst [vmem:[#allocation5] sm:$0xff] %v1241
        %1246 = vst [vmem:[#allocation5 + $0x8] sm:$0xff] %v1242
        %1247 = vst [vmem:[#allocation5 + $0x10] sm:$0xff] %v1243
        %1248 = vst [vmem:[#allocation5 + $0x18] sm:$0xff] %v1244
        %1249 = vst [vmem:[%s7] sm:$0xff] 0.0
        %1250 = vst [vmem:[%s7 + $0x8] sm:$0xff] 0.0
        %1251 = vst [vmem:[%s7 + $0x10] sm:$0xff] 0.0
        %1252 = vst [vmem:[%s7 + $0x18] sm:$0xff] 0.0
        %1253 = vst [vmem:[%s7 + $0x20] sm:$0xff] 0.0
        %1254 = vst [vmem:[%s7 + $0x28] sm:$0xff] 0.0
        %1255 = vst [vmem:[%s7 + $0x30] sm:$0xff] 0.0
        %1256 = vst [vmem:[%s7 + $0x38] sm:$0xff] 0.0
        %1257 = vst [vmem:[%s8] sm:$0xff] 0.0
        %1258 = vst [vmem:[%s8 + $0x8] sm:$0xff] 0.0
        %1259 = vst [vmem:[%s8 + $0x10] sm:$0xff] 0.0
        %1260 = vst [vmem:[%s8 + $0x18] sm:$0xff] 0.0
        %1261 = vst [vmem:[%s8 + $0x20] sm:$0xff] 0.0
        %1262 = vst [vmem:[%s8 + $0x28] sm:$0xff] 0.0
        %1263 = vst [vmem:[%s8 + $0x30] sm:$0xff] 0.0
        %1264 = vst [vmem:[%s8 + $0x38] sm:$0xff] 0.0
      $region56: #{layers_forward.1} parent=47 // pred_fallthru
        _
      %p1265 = scmp.eq.s32.totalorder %s24, 1
      %p1266 = pnand %p1265, %p1157
      %p1267 = pneg %p1266
      // Predicated region
      $region57: #{layers_forward.1} parent=47 // pred_check
        _
      $region58: #{layers_forward.1} parent=47 // pred_check_branch
        %1269 = sbr.rel (%p1266) target = $region60
      $region59: #{layers_forward.1} parent=47 // pred_region
        %v1270 = vld [vmem:[%s334] sm:$0x1]
        %v1271 = vld [vmem:[%s7] sm:$0xff]
        %v1272 = vld [vmem:[%s7 + $0x8] sm:$0xff]
        %v1273 = vld [vmem:[%s7 + $0x10] sm:$0xff]
        %v1274 = vld [vmem:[%s7 + $0x18] sm:$0xff]
        %v1275 = vld [vmem:[%s7 + $0x20] sm:$0xff]
        %v1276 = vld [vmem:[%s7 + $0x28] sm:$0xff]
        %v1277 = vld [vmem:[%s7 + $0x30] sm:$0xff]
        %v1278 = vld [vmem:[%s7 + $0x38] sm:$0xff]
        %v1280 = vlaneseq
        %v1281 = vshrl.u32 %v1280, 7
        %v1282 = vsub.s32 0, %v1281
        %v1283 = vrot.slane %v1270, %v1282
        %v1285 = vadd.f32 %v1271, %v1283
        %v1286 = vadd.f32 %v1272, %v1283
        %v1287 = vadd.f32 %v1273, %v1283
        %v1288 = vadd.f32 %v1274, %v1283
        %v1289 = vadd.f32 %v1275, %v1283
        %v1290 = vadd.f32 %v1276, %v1283
        %v1291 = vadd.f32 %v1277, %v1283
        %v1292 = vadd.f32 %v1278, %v1283
        %v1293 = vmax.f32 %v1285, 0.0
        %v1294 = vmax.f32 %v1286, 0.0
        %v1295 = vmax.f32 %v1287, 0.0
        %v1296 = vmax.f32 %v1288, 0.0
        %v1297 = vmax.f32 %v1289, 0.0
        %v1298 = vmax.f32 %v1290, 0.0
        %v1299 = vmax.f32 %v1291, 0.0
        %v1300 = vmax.f32 %v1292, 0.0
        %1301 = vst [vmem:[%s7] sm:$0xff] %v1293
        %1302 = vst [vmem:[%s7 + $0x8] sm:$0xff] %v1294
        %1303 = vst [vmem:[%s7 + $0x10] sm:$0xff] %v1295
        %1304 = vst [vmem:[%s7 + $0x18] sm:$0xff] %v1296
        %1305 = vst [vmem:[%s7 + $0x20] sm:$0xff] %v1297
        %1306 = vst [vmem:[%s7 + $0x28] sm:$0xff] %v1298
        %1307 = vst [vmem:[%s7 + $0x30] sm:$0xff] %v1299
        %1308 = vst [vmem:[%s7 + $0x38] sm:$0xff] %v1300
        %v1309 = vld [vmem:[%s8] sm:$0xff]
        %v1310 = vld [vmem:[%s8 + $0x8] sm:$0xff]
        %v1311 = vld [vmem:[%s8 + $0x10] sm:$0xff]
        %v1312 = vld [vmem:[%s8 + $0x18] sm:$0xff]
        %v1313 = vld [vmem:[%s8 + $0x20] sm:$0xff]
        %v1314 = vld [vmem:[%s8 + $0x28] sm:$0xff]
        %v1315 = vld [vmem:[%s8 + $0x30] sm:$0xff]
        %v1316 = vld [vmem:[%s8 + $0x38] sm:$0xff]
        %v1317 = vadd.f32 %v1309, %v1283
        %v1318 = vadd.f32 %v1310, %v1283
        %v1319 = vadd.f32 %v1311, %v1283
        %v1320 = vadd.f32 %v1312, %v1283
        %v1321 = vadd.f32 %v1313, %v1283
        %v1322 = vadd.f32 %v1314, %v1283
        %v1323 = vadd.f32 %v1315, %v1283
        %v1324 = vadd.f32 %v1316, %v1283
        %v1325 = vmax.f32 %v1317, 0.0
        %v1326 = vmax.f32 %v1318, 0.0
        %v1327 = vmax.f32 %v1319, 0.0
        %v1328 = vmax.f32 %v1320, 0.0
        %v1329 = vmax.f32 %v1321, 0.0
        %v1330 = vmax.f32 %v1322, 0.0
        %v1331 = vmax.f32 %v1323, 0.0
        %v1332 = vmax.f32 %v1324, 0.0
        %1333 = vst [vmem:[%s8] sm:$0xff] %v1325
        %1334 = vst [vmem:[%s8 + $0x8] sm:$0xff] %v1326
        %1335 = vst [vmem:[%s8 + $0x10] sm:$0xff] %v1327
        %1336 = vst [vmem:[%s8 + $0x18] sm:$0xff] %v1328
        %1337 = vst [vmem:[%s8 + $0x20] sm:$0xff] %v1329
        %1338 = vst [vmem:[%s8 + $0x28] sm:$0xff] %v1330
        %1339 = vst [vmem:[%s8 + $0x30] sm:$0xff] %v1331
        %1340 = vst [vmem:[%s8 + $0x38] sm:$0xff] %v1332
      $region60: #{layers_forward.1} parent=47 // pred_fallthru
        _
      // Predicated region
      $region61: #{layers_forward.1} parent=47 // pred_check
        %p1341 = pneg %p207
      $region62: #{layers_forward.1} parent=47 // pred_check_branch
        %1343 = sbr.rel (%p1341) target = $region64
      $region63: #{layers_forward.1} parent=47 // pred_region
        _
      $region64: #{layers_forward.1} parent=47 // pred_fallthru
        _
      // Predicated region
      $region65: #{layers_forward.1} parent=47 // pred_check
        %p1344 = pneg %p228
      $region66: #{layers_forward.1} parent=47 // pred_check_branch
        %1346 = sbr.rel (%p1344) target = $region68
      $region67: #{layers_forward.1} parent=47 // pred_region
        _
      $region68: #{layers_forward.1} parent=47 // pred_fallthru
        _
      // Predicated region
      $region69: #{layers_forward.1} parent=47 // pred_check
        %p1347 = pneg %p207
      $region70: #{layers_forward.1} parent=47 // pred_check_branch
        %1349 = sbr.rel (%p1347) target = $region72
      $region71: #{layers_forward.1} parent=47 // pred_region
        _
      $region72: #{layers_forward.1} parent=47 // pred_fallthru
        _
      // Predicated region
      $region73: #{layers_forward.1} parent=47 // pred_check
        %p1350 = pneg %p228
      $region74: #{layers_forward.1} parent=47 // pred_check_branch
        %1352 = sbr.rel (%p1350) target = $region76
      $region75: #{layers_forward.1} parent=47 // pred_region
        _
      $region76: #{layers_forward.1} parent=47 // pred_fallthru
        _
    $region48: #{layers_forward.1} parent=5 // pred_fallthru
      _
    %p1353 = scmp.le.s32.totalorder 2, %s15
    // Predicated region
    $region77: #{layers_forward.1} parent=5 // pred_check
      %p1354 = pneg %p1353
    $region78: #{layers_forward.1} parent=5 // pred_check_branch
      %1356 = sbr.rel (%p1354) target = $region80
    $region79: #{layers_forward.1} parent=5 // pred_region
      %s1357 = ssub.s32 %s15, 2
    $region80: #{layers_forward.1} parent=5 // pred_fallthru
      _
  $region6: #{layers_forward.1} parent=0 // loop_footer
    %s19 = sadd.s32 1, %s15
  $region7: #{layers_forward.1} parent=0 // loop_footer_branch
    %14 = sbr.rel target = $region3
  $region8: #{layers_forward.1} parent=0 // loop_exit
    _

</llo_original>
